<compile_context>
chip_gen: v6e
topology: v6e:2x2x1
jax: 0.10.0
libtpu: 0.0.40
codegen_flags: <defaults>
</compile_context>

<pallas_src>
import functools

import jax
import jax.numpy as jnp
from jax.experimental import pallas as pl
from jax.experimental.pallas import tpu as pltpu

HIDDEN = 256
# Slab row layout (per net), all rows are length HIDDEN, f32:
#   0: f(eps_out1)   1: f(eps_in2)   2: f(eps_out2)   3: f(eps_in3)
#   4: b1_mu         5: b1_sigma     6: b2_mu         7: b2_sigma
#   8: scalars [f(eps_out3), b3_mu, b3_sigma, 0, ...]
SLAB_ROWS = 9


def _make_kernel(nb):
    f32 = jnp.float32
    bf16 = jnp.bfloat16

    def kernel(sa_ref, w1_ref, w2_ref, w3_ref, e1i_ref, slab_ref, out_ref):
        x = sa_ref[...]                       # [B, D] f32
        x_bf = x.astype(bf16)

        cols = []
        for j in range(nb):                   # nb is small & static -> unrolled
            # ---- layer 1: h = x@mu1 + ((x*e1i)@sig1)*e1o + b1_eff ; ReLU ----
            e1i = e1i_ref[j]                  # [1, D]  f32 (lane-dense row)
            e1o = slab_ref[j, 0:1, :]         # [1, H]
            xs = (x * e1i).astype(bf16)       # [B, D]
            h = jnp.dot(x_bf, w1_ref[j, 0], preferred_element_type=f32)
            h = h + jnp.dot(xs, w1_ref[j, 1], preferred_element_type=f32) * e1o
            h = h + slab_ref[j, 4:5, :] + slab_ref[j, 5:6, :] * e1o
            h = jnp.maximum(h, 0.0)           # [B, H] f32

            # ---- layer 2 -----------------------------------------------------
            e2i = slab_ref[j, 1:2, :]         # [1, H]
            e2o = slab_ref[j, 2:3, :]         # [1, H]
            hs = (h * e2i).astype(bf16)
            g = jnp.dot(h.astype(bf16), w2_ref[j, 0], preferred_element_type=f32)
            g = g + jnp.dot(hs, w2_ref[j, 1], preferred_element_type=f32) * e2o
            g = g + slab_ref[j, 6:7, :] + slab_ref[j, 7:8, :] * e2o
            g = jnp.maximum(g, 0.0)           # [B, H] f32

            # ---- layer 3 (out_features == 1): VPU multiply + lane reduce -----
            e3i = slab_ref[j, 3:4, :]         # [1, H]
            sc = slab_ref[j, 8:9, :]          # [1, H]: [e3o, b3_mu, b3_sig, ...]
            e3o = sc[:, 0:1]                  # [1, 1]
            b3 = sc[:, 1:2] + sc[:, 2:3] * e3o
            w3 = (w3_ref[j, 0].astype(f32)
                  + w3_ref[j, 1].astype(f32) * (e3i * e3o))       # [1, H]
            q = jnp.sum(g * w3, axis=1, keepdims=True) + b3       # [B, 1]
            cols.append(q)

        # Single store per grid step.
        out_ref[0] = jnp.concatenate(cols, axis=1).astype(out_ref.dtype)  # [B, nb]

    return kernel


def _choose_blocking(n_nets):
    """nets-per-block & grid length; keep the grid even (v7x has 2 TCs)."""
    if n_nets <= 1:
        return 1, 1
    if n_nets <= 8:
        nb = pl.cdiv(n_nets, 2)
        n_blocks = 2
    else:
        nb = 4
        n_blocks = pl.cdiv(n_nets, nb)
        if n_blocks % 2:
            n_blocks += 1
    return nb, n_blocks


def _pad_nets(a, n_pad):
    n = a.shape[0]
    if n == n_pad:
        return a
    return jnp.pad(a, [(0, n_pad - n)] + [(0, 0)] * (a.ndim - 1))


def noisy_ensemble_forward(state, action, params):
    """state: [B, S], action: [B, A]; returns [B, n_nets, 1] (torch layout)."""
    sa = jnp.concatenate([state, action], axis=1)      # torch.cat(dim=1)
    B, D = sa.shape
    w1, w2, w3t, e1i, slab = params
    n_nets = w1.shape[0]
    H = HIDDEN

    nb, n_blocks = _choose_blocking(n_nets)
    n_pad = nb * n_blocks
    w1p = _pad_nets(w1, n_pad)
    w2p = _pad_nets(w2, n_pad)
    w3p = _pad_nets(w3t, n_pad)
    e1ip = _pad_nets(e1i, n_pad)
    slabp = _pad_nets(slab, n_pad)

    grid_spec = pl.GridSpec(
        grid=(n_blocks,),
        in_specs=[
            pl.BlockSpec((B, D), lambda i: (0, 0)),                    # sa
            pl.BlockSpec((nb, 2, D, H), lambda i: (i, 0, 0, 0)),       # w1 mu/sig (bf16)
            pl.BlockSpec((nb, 2, H, H), lambda i: (i, 0, 0, 0)),       # w2 mu/sig (bf16)
            pl.BlockSpec((nb, 2, 1, H), lambda i: (i, 0, 0, 0)),       # w3^T mu/sig (bf16)
            pl.BlockSpec((nb, 1, D), lambda i: (i, 0, 0)),             # f(eps_in1) rows
            pl.BlockSpec((nb, SLAB_ROWS, H), lambda i: (i, 0, 0)),     # packed small slab
        ],
        out_specs=pl.BlockSpec((1, B, nb), lambda i: (i, 0, 0)),
    )

    out = pl.pallas_call(
        _make_kernel(nb),
        out_shape=jax.ShapeDtypeStruct((n_blocks, B, nb), jnp.float32),
        grid_spec=grid_spec,
        compiler_params=pltpu.CompilerParams(
            dimension_semantics=("parallel",)),
    )(sa, w1p, w2p, w3p, e1ip, slabp)

    # (n_blocks, B, nb) -> (B, n_pad) -> [B, n_nets, 1]  (torch.stack(..., dim=1))
    out = jnp.transpose(out, (1, 0, 2)).reshape(B, n_pad)
    return out[:, :n_nets, None]


def _f(x):
    # NoisyNet factorized-noise transform: f(x) = sign(x) * sqrt(|x|)
    return jnp.sign(x) * jnp.sqrt(jnp.abs(x))


def init_params(key, state_dim, action_dim, n_nets, sigma0=0.5):
    """Packed params:
       w1:  [n, 2, D, H]  bf16 (mu, sigma)
       w2:  [n, 2, H, H]  bf16
       w3t: [n, 2, 1, H]  bf16 (layer-3 weight stored transposed)
       e1i: [n, 1, D]     f32  (f(eps_in1), lane-dense row)
       slab:[n, 9, H]     f32  (see SLAB row layout above)
    """
    D = state_dim + action_dim
    H = HIDDEN
    dims = [(D, H), (H, H), (H, 1)]

    per_layer = []
    for (fan_in, fan_out) in dims:
        w_mu_l, w_sg_l, b_mu_l, b_sg_l, ei_l, eo_l = [], [], [], [], [], []
        for _ in range(n_nets):
            key, k_mu_w, k_mu_b, k_ei, k_eo = jax.random.split(key, 5)
            bound = 1.0 / jnp.sqrt(fan_in)
            w_mu_l.append(jax.random.uniform(k_mu_w, (fan_in, fan_out),
                                             minval=-bound, maxval=bound))
            b_mu_l.append(jax.random.uniform(k_mu_b, (fan_out,),
                                             minval=-bound, maxval=bound))
            w_sg_l.append(jnp.full((fan_in, fan_out), sigma0 / jnp.sqrt(fan_in)))
            b_sg_l.append(jnp.full((fan_out,), sigma0 / jnp.sqrt(fan_in)))
            ei_l.append(_f(jax.random.normal(k_ei, (fan_in,))))
            eo_l.append(_f(jax.random.normal(k_eo, (fan_out,))))
        per_layer.append(dict(
            w_mu=jnp.stack(w_mu_l, 0), w_sg=jnp.stack(w_sg_l, 0),
            b_mu=jnp.stack(b_mu_l, 0), b_sg=jnp.stack(b_sg_l, 0),
            ei=jnp.stack(ei_l, 0), eo=jnp.stack(eo_l, 0)))

    L1, L2, L3 = per_layer
    bf16, f32 = jnp.bfloat16, jnp.float32

    w1 = jnp.stack([L1["w_mu"], L1["w_sg"]], axis=1).astype(bf16)     # [n,2,D,H]
    w2 = jnp.stack([L2["w_mu"], L2["w_sg"]], axis=1).astype(bf16)     # [n,2,H,H]
    # layer-3 weight is [H,1]; store transposed as a [1,H] row per (mu,sigma)
    w3t = jnp.stack([jnp.swapaxes(L3["w_mu"], -1, -2),
                     jnp.swapaxes(L3["w_sg"], -1, -2)], axis=1).astype(bf16)  # [n,2,1,H]

    e1i = L1["ei"][:, None, :].astype(f32)                            # [n,1,D]

    # Packed small slab [n, 9, H].
    scal = jnp.zeros((n_nets, H), dtype=f32)
    scal = scal.at[:, 0].set(L3["eo"][:, 0])       # f(eps_out3)
    scal = scal.at[:, 1].set(L3["b_mu"][:, 0])     # b3_mu
    scal = scal.at[:, 2].set(L3["b_sg"][:, 0])     # b3_sigma
    slab = jnp.stack([
        L1["eo"],          # 0: f(eps_out1)
        L2["ei"],          # 1: f(eps_in2)
        L2["eo"],          # 2: f(eps_out2)
        L3["ei"],          # 3: f(eps_in3)
        L1["b_mu"],        # 4
        L1["b_sg"],        # 5
        L2["b_mu"],        # 6
        L2["b_sg"],        # 7
        scal,              # 8
    ], axis=1).astype(f32)                                            # [n,9,H]

    return (w1, w2, w3t, e1i, slab)


def reference_forward(state, action, params):
    """Pure-JAX reference mirroring the kernel's bf16-weight / f32-acc math."""
    sa = jnp.concatenate([state, action], axis=1)
    w1, w2, w3t, e1i, slab = params
    n = w1.shape[0]
    x_bf = sa.astype(jnp.bfloat16)
    f32 = jnp.float32
    outs = []
    for i in range(n):
        e1o, e2i, e2o, e3i = slab[i, 0:1], slab[i, 1:2], slab[i, 2:3], slab[i, 3:4]
        b1m, b1s, b2m, b2s = slab[i, 4:5], slab[i, 5:6], slab[i, 6:7], slab[i, 7:8]
        sc = slab[i, 8:9]
        e3o, b3m, b3s = sc[:, 0:1], sc[:, 1:2], sc[:, 2:3]

        xs = (sa * e1i[i]).astype(jnp.bfloat16)
        h = jnp.dot(x_bf, w1[i, 0], preferred_element_type=f32)
        h = h + jnp.dot(xs, w1[i, 1], preferred_element_type=f32) * e1o
        h = jnp.maximum(h + b1m + b1s * e1o, 0.0)

        hs = (h * e2i).astype(jnp.bfloat16)
        g = jnp.dot(h.astype(jnp.bfloat16), w2[i, 0], preferred_element_type=f32)
        g = g + jnp.dot(hs, w2[i, 1], preferred_element_type=f32) * e2o
        g = jnp.maximum(g + b2m + b2s * e2o, 0.0)

        w3 = w3t[i, 0].astype(f32) + w3t[i, 1].astype(f32) * (e3i * e3o)  # [1,H]
        q = jnp.sum(g * w3, axis=1, keepdims=True) + (b3m + b3s * e3o)    # [B,1]
        outs.append(q)
    return jnp.stack(outs, axis=1)                                        # [B,n,1]


if __name__ == "__main__":
    state_dim, action_dim, n_nets, batch = 16, 4, 5, 8

    key = jax.random.PRNGKey(0)
    k_s, k_a, k_p = jax.random.split(key, 3)
    state = jax.random.normal(k_s, (batch, state_dim), dtype=jnp.float32)
    action = jax.random.normal(k_a, (batch, action_dim), dtype=jnp.float32)
    params = init_params(k_p, state_dim, action_dim, n_nets)

    out = jax.block_until_ready(noisy_ensemble_forward(state, action, params))
    ref = jax.block_until_ready(reference_forward(state, action, params))

    assert out.shape == (batch, n_nets, 1), out.shape
    max_err = float(jnp.max(jnp.abs(out - ref)))
    assert jnp.allclose(out, ref, atol=2e-2, rtol=2e-2), max_err

    print("KERNEL_OK")
</pallas_src>

<mosaic_0001>
module attributes {stable_mosaic.version = 11 : i64} {
  func.func @kernel(%arg0: i32, %arg1: memref<8x20xf32, #tpu.memory_space<vmem>>, %arg2: memref<3x2x20x256xbf16, #tpu.memory_space<vmem>>, %arg3: memref<3x2x256x256xbf16, #tpu.memory_space<vmem>>, %arg4: memref<3x2x1x256xbf16, #tpu.memory_space<vmem>>, %arg5: memref<3x1x20xf32, #tpu.memory_space<vmem>>, %arg6: memref<3x9x256xf32, #tpu.memory_space<vmem>>, %arg7: memref<1x8x3xf32, #tpu.memory_space<vmem>>) attributes {dimension_semantics = [#tpu.dimension_semantics<parallel>], iteration_bounds = array<i64: 2>, scalar_prefetch = 0 : i64, scratch_operands = 0 : i64, tpu.core_type = #tpu.core_type<tc>, window_params = [{pipeline_mode = #tpu.pipeline_mode<synchronous>, transform_indices = @transform_0, window_bounds = array<i64: 8, 20>}, {transform_indices = @transform_1, window_bounds = array<i64: 3, 2, 20, 256>}, {transform_indices = @transform_2, window_bounds = array<i64: 3, 2, 256, 256>}, {transform_indices = @transform_3, window_bounds = array<i64: 3, 2, 1, 256>}, {transform_indices = @transform_4, window_bounds = array<i64: 3, 1, 20>}, {transform_indices = @transform_5, window_bounds = array<i64: 3, 9, 256>}, {transform_indices = @transform_6, window_bounds = array<i64: 1, 8, 3>}]} {
    %c0 = arith.constant 0 : index
    %c0_0 = arith.constant 0 : index
    %0 = vector.load %arg1[%c0, %c0_0] : memref<8x20xf32, #tpu.memory_space<vmem>>, vector<8x20xf32>
    %1 = arith.truncf %0 : vector<8x20xf32> to vector<8x20xbf16>
    %c0_1 = arith.constant 0 : index
    %c0_2 = arith.constant 0 : index
    %c0_3 = arith.constant 0 : index
    %2 = vector.load %arg5[%c0_1, %c0_2, %c0_3] : memref<3x1x20xf32, #tpu.memory_space<vmem>>, vector<1x1x20xf32>
    %3 = vector.shape_cast %2 : vector<1x1x20xf32> to vector<1x20xf32>
    %c0_4 = arith.constant 0 : index
    %c0_5 = arith.constant 0 : index
    %c0_6 = arith.constant 0 : index
    %4 = vector.load %arg6[%c0_4, %c0_5, %c0_6] : memref<3x9x256xf32, #tpu.memory_space<vmem>>, vector<1x1x256xf32>
    %5 = vector.shape_cast %4 : vector<1x1x256xf32> to vector<1x256xf32>
    %6 = vector.broadcast %3 : vector<1x20xf32> to vector<8x20xf32>
    %7 = arith.mulf %0, %6 : vector<8x20xf32>
    %8 = arith.truncf %7 : vector<8x20xf32> to vector<8x20xbf16>
    %c0_7 = arith.constant 0 : index
    %c0_8 = arith.constant 0 : index
    %c0_9 = arith.constant 0 : index
    %c0_10 = arith.constant 0 : index
    %9 = vector.load %arg2[%c0_7, %c0_8, %c0_9, %c0_10] : memref<3x2x20x256xbf16, #tpu.memory_space<vmem>>, vector<1x1x20x256xbf16>
    %10 = vector.shape_cast %9 : vector<1x1x20x256xbf16> to vector<20x256xbf16>
    %cst = arith.constant dense<0.000000e+00> : vector<8x256xf32>
    %11 = tpu.matmul %1, %10, %cst {dimension_numbers = #tpu.dot_dimension_numbers<[1], [0], [0], [1], [0, 0, 1, 1], [], []>} : vector<8x20xbf16>, vector<20x256xbf16>, vector<8x256xf32> -> vector<8x256xf32>
    %c0_11 = arith.constant 0 : index
    %c1 = arith.constant 1 : index
    %c0_12 = arith.constant 0 : index
    %c0_13 = arith.constant 0 : index
    %12 = vector.load %arg2[%c0_11, %c1, %c0_12, %c0_13] : memref<3x2x20x256xbf16, #tpu.memory_space<vmem>>, vector<1x1x20x256xbf16>
    %13 = vector.shape_cast %12 : vector<1x1x20x256xbf16> to vector<20x256xbf16>
    %cst_14 = arith.constant dense<0.000000e+00> : vector<8x256xf32>
    %14 = tpu.matmul %8, %13, %cst_14 {dimension_numbers = #tpu.dot_dimension_numbers<[1], [0], [0], [1], [0, 0, 1, 1], [], []>} : vector<8x20xbf16>, vector<20x256xbf16>, vector<8x256xf32> -> vector<8x256xf32>
    %15 = vector.broadcast %5 : vector<1x256xf32> to vector<8x256xf32>
    %16 = arith.mulf %14, %15 : vector<8x256xf32>
    %17 = arith.addf %11, %16 : vector<8x256xf32>
    %c0_15 = arith.constant 0 : index
    %c4 = arith.constant 4 : index
    %c0_16 = arith.constant 0 : index
    %18 = vector.load %arg6[%c0_15, %c4, %c0_16] : memref<3x9x256xf32, #tpu.memory_space<vmem>>, vector<1x1x256xf32>
    %19 = vector.shape_cast %18 : vector<1x1x256xf32> to vector<1x256xf32>
    %20 = vector.broadcast %19 : vector<1x256xf32> to vector<8x256xf32>
    %21 = arith.addf %17, %20 : vector<8x256xf32>
    %c0_17 = arith.constant 0 : index
    %c5 = arith.constant 5 : index
    %c0_18 = arith.constant 0 : index
    %22 = vector.load %arg6[%c0_17, %c5, %c0_18] : memref<3x9x256xf32, #tpu.memory_space<vmem>>, vector<1x1x256xf32>
    %23 = vector.shape_cast %22 : vector<1x1x256xf32> to vector<1x256xf32>
    %24 = arith.mulf %23, %5 : vector<1x256xf32>
    %25 = vector.broadcast %24 : vector<1x256xf32> to vector<8x256xf32>
    %26 = arith.addf %21, %25 : vector<8x256xf32>
    %cst_19 = arith.constant 0.000000e+00 : f32
    %27 = vector.broadcast %cst_19 : f32 to vector<8x256xf32>
    %28 = arith.maximumf %26, %27 : vector<8x256xf32>
    %c0_20 = arith.constant 0 : index
    %c1_21 = arith.constant 1 : index
    %c0_22 = arith.constant 0 : index
    %29 = vector.load %arg6[%c0_20, %c1_21, %c0_22] : memref<3x9x256xf32, #tpu.memory_space<vmem>>, vector<1x1x256xf32>
    %30 = vector.shape_cast %29 : vector<1x1x256xf32> to vector<1x256xf32>
    %c0_23 = arith.constant 0 : index
    %c2 = arith.constant 2 : index
    %c0_24 = arith.constant 0 : index
    %31 = vector.load %arg6[%c0_23, %c2, %c0_24] : memref<3x9x256xf32, #tpu.memory_space<vmem>>, vector<1x1x256xf32>
    %32 = vector.shape_cast %31 : vector<1x1x256xf32> to vector<1x256xf32>
    %33 = vector.broadcast %30 : vector<1x256xf32> to vector<8x256xf32>
    %34 = arith.mulf %28, %33 : vector<8x256xf32>
    %35 = arith.truncf %34 : vector<8x256xf32> to vector<8x256xbf16>
    %36 = arith.truncf %28 : vector<8x256xf32> to vector<8x256xbf16>
    %c0_25 = arith.constant 0 : index
    %c0_26 = arith.constant 0 : index
    %c0_27 = arith.constant 0 : index
    %c0_28 = arith.constant 0 : index
    %37 = vector.load %arg3[%c0_25, %c0_26, %c0_27, %c0_28] : memref<3x2x256x256xbf16, #tpu.memory_space<vmem>>, vector<1x1x256x256xbf16>
    %38 = vector.shape_cast %37 : vector<1x1x256x256xbf16> to vector<256x256xbf16>
    %cst_29 = arith.constant dense<0.000000e+00> : vector<8x256xf32>
    %39 = tpu.matmul %36, %38, %cst_29 {dimension_numbers = #tpu.dot_dimension_numbers<[1], [0], [0], [1], [0, 0, 1, 1], [], []>} : vector<8x256xbf16>, vector<256x256xbf16>, vector<8x256xf32> -> vector<8x256xf32>
    %c0_30 = arith.constant 0 : index
    %c1_31 = arith.constant 1 : index
    %c0_32 = arith.constant 0 : index
    %c0_33 = arith.constant 0 : index
    %40 = vector.load %arg3[%c0_30, %c1_31, %c0_32, %c0_33] : memref<3x2x256x256xbf16, #tpu.memory_space<vmem>>, vector<1x1x256x256xbf16>
    %41 = vector.shape_cast %40 : vector<1x1x256x256xbf16> to vector<256x256xbf16>
    %cst_34 = arith.constant dense<0.000000e+00> : vector<8x256xf32>
    %42 = tpu.matmul %35, %41, %cst_34 {dimension_numbers = #tpu.dot_dimension_numbers<[1], [0], [0], [1], [0, 0, 1, 1], [], []>} : vector<8x256xbf16>, vector<256x256xbf16>, vector<8x256xf32> -> vector<8x256xf32>
    %43 = vector.broadcast %32 : vector<1x256xf32> to vector<8x256xf32>
    %44 = arith.mulf %42, %43 : vector<8x256xf32>
    %45 = arith.addf %39, %44 : vector<8x256xf32>
    %c0_35 = arith.constant 0 : index
    %c6 = arith.constant 6 : index
    %c0_36 = arith.constant 0 : index
    %46 = vector.load %arg6[%c0_35, %c6, %c0_36] : memref<3x9x256xf32, #tpu.memory_space<vmem>>, vector<1x1x256xf32>
    %47 = vector.shape_cast %46 : vector<1x1x256xf32> to vector<1x256xf32>
    %48 = vector.broadcast %47 : vector<1x256xf32> to vector<8x256xf32>
    %49 = arith.addf %45, %48 : vector<8x256xf32>
    %c0_37 = arith.constant 0 : index
    %c7 = arith.constant 7 : index
    %c0_38 = arith.constant 0 : index
    %50 = vector.load %arg6[%c0_37, %c7, %c0_38] : memref<3x9x256xf32, #tpu.memory_space<vmem>>, vector<1x1x256xf32>
    %51 = vector.shape_cast %50 : vector<1x1x256xf32> to vector<1x256xf32>
    %52 = arith.mulf %51, %32 : vector<1x256xf32>
    %53 = vector.broadcast %52 : vector<1x256xf32> to vector<8x256xf32>
    %54 = arith.addf %49, %53 : vector<8x256xf32>
    %cst_39 = arith.constant 0.000000e+00 : f32
    %55 = vector.broadcast %cst_39 : f32 to vector<8x256xf32>
    %56 = arith.maximumf %54, %55 : vector<8x256xf32>
    %c0_40 = arith.constant 0 : index
    %c3 = arith.constant 3 : index
    %c0_41 = arith.constant 0 : index
    %57 = vector.load %arg6[%c0_40, %c3, %c0_41] : memref<3x9x256xf32, #tpu.memory_space<vmem>>, vector<1x1x256xf32>
    %58 = vector.shape_cast %57 : vector<1x1x256xf32> to vector<1x256xf32>
    %c0_42 = arith.constant 0 : index
    %c8 = arith.constant 8 : index
    %c0_43 = arith.constant 0 : index
    %59 = vector.load %arg6[%c0_42, %c8, %c0_43] : memref<3x9x256xf32, #tpu.memory_space<vmem>>, vector<1x1x256xf32>
    %60 = vector.shape_cast %59 : vector<1x1x256xf32> to vector<1x256xf32>
    %61 = vector.extract_strided_slice %60 {offsets = [0, 0], sizes = [1, 1], strides = [1, 1]} : vector<1x256xf32> to vector<1x1xf32>
    %62 = vector.extract_strided_slice %60 {offsets = [0, 1], sizes = [1, 1], strides = [1, 1]} : vector<1x256xf32> to vector<1x1xf32>
    %63 = vector.extract_strided_slice %60 {offsets = [0, 2], sizes = [1, 1], strides = [1, 1]} : vector<1x256xf32> to vector<1x1xf32>
    %64 = arith.mulf %63, %61 : vector<1x1xf32>
    %65 = arith.addf %62, %64 : vector<1x1xf32>
    %c0_44 = arith.constant 0 : index
    %c0_45 = arith.constant 0 : index
    %c0_46 = arith.constant 0 : index
    %c0_47 = arith.constant 0 : index
    %66 = vector.load %arg4[%c0_44, %c0_45, %c0_46, %c0_47] : memref<3x2x1x256xbf16, #tpu.memory_space<vmem>>, vector<1x1x1x256xbf16>
    %67 = vector.shape_cast %66 : vector<1x1x1x256xbf16> to vector<1x256xbf16>
    %68 = arith.extf %67 : vector<1x256xbf16> to vector<1x256xf32>
    %c0_48 = arith.constant 0 : index
    %c1_49 = arith.constant 1 : index
    %c0_50 = arith.constant 0 : index
    %c0_51 = arith.constant 0 : index
    %69 = vector.load %arg4[%c0_48, %c1_49, %c0_50, %c0_51] : memref<3x2x1x256xbf16, #tpu.memory_space<vmem>>, vector<1x1x1x256xbf16>
    %70 = vector.shape_cast %69 : vector<1x1x1x256xbf16> to vector<1x256xbf16>
    %71 = arith.extf %70 : vector<1x256xbf16> to vector<1x256xf32>
    %72 = vector.broadcast %61 : vector<1x1xf32> to vector<1x256xf32>
    %73 = arith.mulf %58, %72 : vector<1x256xf32>
    %74 = arith.mulf %71, %73 : vector<1x256xf32>
    %75 = arith.addf %68, %74 : vector<1x256xf32>
    %76 = vector.broadcast %75 : vector<1x256xf32> to vector<8x256xf32>
    %77 = arith.mulf %56, %76 : vector<8x256xf32>
    %cst_52 = arith.constant dense<0.000000e+00> : vector<8xf32>
    %78 = vector.multi_reduction <add>, %77, %cst_52 [1] : vector<8x256xf32> to vector<8xf32>
    %79 = vector.shape_cast %78 : vector<8xf32> to vector<8x1xf32>
    %80 = vector.broadcast %65 : vector<1x1xf32> to vector<8x1xf32>
    %81 = arith.addf %79, %80 : vector<8x1xf32>
    %c1_53 = arith.constant 1 : index
    %c0_54 = arith.constant 0 : index
    %c0_55 = arith.constant 0 : index
    %82 = vector.load %arg5[%c1_53, %c0_54, %c0_55] : memref<3x1x20xf32, #tpu.memory_space<vmem>>, vector<1x1x20xf32>
    %83 = vector.shape_cast %82 : vector<1x1x20xf32> to vector<1x20xf32>
    %c1_56 = arith.constant 1 : index
    %c0_57 = arith.constant 0 : index
    %c0_58 = arith.constant 0 : index
    %84 = vector.load %arg6[%c1_56, %c0_57, %c0_58] : memref<3x9x256xf32, #tpu.memory_space<vmem>>, vector<1x1x256xf32>
    %85 = vector.shape_cast %84 : vector<1x1x256xf32> to vector<1x256xf32>
    %86 = vector.broadcast %83 : vector<1x20xf32> to vector<8x20xf32>
    %87 = arith.mulf %0, %86 : vector<8x20xf32>
    %88 = arith.truncf %87 : vector<8x20xf32> to vector<8x20xbf16>
    %c1_59 = arith.constant 1 : index
    %c0_60 = arith.constant 0 : index
    %c0_61 = arith.constant 0 : index
    %c0_62 = arith.constant 0 : index
    %89 = vector.load %arg2[%c1_59, %c0_60, %c0_61, %c0_62] : memref<3x2x20x256xbf16, #tpu.memory_space<vmem>>, vector<1x1x20x256xbf16>
    %90 = vector.shape_cast %89 : vector<1x1x20x256xbf16> to vector<20x256xbf16>
    %cst_63 = arith.constant dense<0.000000e+00> : vector<8x256xf32>
    %91 = tpu.matmul %1, %90, %cst_63 {dimension_numbers = #tpu.dot_dimension_numbers<[1], [0], [0], [1], [0, 0, 1, 1], [], []>} : vector<8x20xbf16>, vector<20x256xbf16>, vector<8x256xf32> -> vector<8x256xf32>
    %c1_64 = arith.constant 1 : index
    %c1_65 = arith.constant 1 : index
    %c0_66 = arith.constant 0 : index
    %c0_67 = arith.constant 0 : index
    %92 = vector.load %arg2[%c1_64, %c1_65, %c0_66, %c0_67] : memref<3x2x20x256xbf16, #tpu.memory_space<vmem>>, vector<1x1x20x256xbf16>
    %93 = vector.shape_cast %92 : vector<1x1x20x256xbf16> to vector<20x256xbf16>
    %cst_68 = arith.constant dense<0.000000e+00> : vector<8x256xf32>
    %94 = tpu.matmul %88, %93, %cst_68 {dimension_numbers = #tpu.dot_dimension_numbers<[1], [0], [0], [1], [0, 0, 1, 1], [], []>} : vector<8x20xbf16>, vector<20x256xbf16>, vector<8x256xf32> -> vector<8x256xf32>
    %95 = vector.broadcast %85 : vector<1x256xf32> to vector<8x256xf32>
    %96 = arith.mulf %94, %95 : vector<8x256xf32>
    %97 = arith.addf %91, %96 : vector<8x256xf32>
    %c1_69 = arith.constant 1 : index
    %c4_70 = arith.constant 4 : index
    %c0_71 = arith.constant 0 : index
    %98 = vector.load %arg6[%c1_69, %c4_70, %c0_71] : memref<3x9x256xf32, #tpu.memory_space<vmem>>, vector<1x1x256xf32>
    %99 = vector.shape_cast %98 : vector<1x1x256xf32> to vector<1x256xf32>
    %100 = vector.broadcast %99 : vector<1x256xf32> to vector<8x256xf32>
    %101 = arith.addf %97, %100 : vector<8x256xf32>
    %c1_72 = arith.constant 1 : index
    %c5_73 = arith.constant 5 : index
    %c0_74 = arith.constant 0 : index
    %102 = vector.load %arg6[%c1_72, %c5_73, %c0_74] : memref<3x9x256xf32, #tpu.memory_space<vmem>>, vector<1x1x256xf32>
    %103 = vector.shape_cast %102 : vector<1x1x256xf32> to vector<1x256xf32>
    %104 = arith.mulf %103, %85 : vector<1x256xf32>
    %105 = vector.broadcast %104 : vector<1x256xf32> to vector<8x256xf32>
    %106 = arith.addf %101, %105 : vector<8x256xf32>
    %cst_75 = arith.constant 0.000000e+00 : f32
    %107 = vector.broadcast %cst_75 : f32 to vector<8x256xf32>
    %108 = arith.maximumf %106, %107 : vector<8x256xf32>
    %c1_76 = arith.constant 1 : index
    %c1_77 = arith.constant 1 : index
    %c0_78 = arith.constant 0 : index
    %109 = vector.load %arg6[%c1_76, %c1_77, %c0_78] : memref<3x9x256xf32, #tpu.memory_space<vmem>>, vector<1x1x256xf32>
    %110 = vector.shape_cast %109 : vector<1x1x256xf32> to vector<1x256xf32>
    %c1_79 = arith.constant 1 : index
    %c2_80 = arith.constant 2 : index
    %c0_81 = arith.constant 0 : index
    %111 = vector.load %arg6[%c1_79, %c2_80, %c0_81] : memref<3x9x256xf32, #tpu.memory_space<vmem>>, vector<1x1x256xf32>
    %112 = vector.shape_cast %111 : vector<1x1x256xf32> to vector<1x256xf32>
    %113 = vector.broadcast %110 : vector<1x256xf32> to vector<8x256xf32>
    %114 = arith.mulf %108, %113 : vector<8x256xf32>
    %115 = arith.truncf %114 : vector<8x256xf32> to vector<8x256xbf16>
    %116 = arith.truncf %108 : vector<8x256xf32> to vector<8x256xbf16>
    %c1_82 = arith.constant 1 : index
    %c0_83 = arith.constant 0 : index
    %c0_84 = arith.constant 0 : index
    %c0_85 = arith.constant 0 : index
    %117 = vector.load %arg3[%c1_82, %c0_83, %c0_84, %c0_85] : memref<3x2x256x256xbf16, #tpu.memory_space<vmem>>, vector<1x1x256x256xbf16>
    %118 = vector.shape_cast %117 : vector<1x1x256x256xbf16> to vector<256x256xbf16>
    %cst_86 = arith.constant dense<0.000000e+00> : vector<8x256xf32>
    %119 = tpu.matmul %116, %118, %cst_86 {dimension_numbers = #tpu.dot_dimension_numbers<[1], [0], [0], [1], [0, 0, 1, 1], [], []>} : vector<8x256xbf16>, vector<256x256xbf16>, vector<8x256xf32> -> vector<8x256xf32>
    %c1_87 = arith.constant 1 : index
    %c1_88 = arith.constant 1 : index
    %c0_89 = arith.constant 0 : index
    %c0_90 = arith.constant 0 : index
    %120 = vector.load %arg3[%c1_87, %c1_88, %c0_89, %c0_90] : memref<3x2x256x256xbf16, #tpu.memory_space<vmem>>, vector<1x1x256x256xbf16>
    %121 = vector.shape_cast %120 : vector<1x1x256x256xbf16> to vector<256x256xbf16>
    %cst_91 = arith.constant dense<0.000000e+00> : vector<8x256xf32>
    %122 = tpu.matmul %115, %121, %cst_91 {dimension_numbers = #tpu.dot_dimension_numbers<[1], [0], [0], [1], [0, 0, 1, 1], [], []>} : vector<8x256xbf16>, vector<256x256xbf16>, vector<8x256xf32> -> vector<8x256xf32>
    %123 = vector.broadcast %112 : vector<1x256xf32> to vector<8x256xf32>
    %124 = arith.mulf %122, %123 : vector<8x256xf32>
    %125 = arith.addf %119, %124 : vector<8x256xf32>
    %c1_92 = arith.constant 1 : index
    %c6_93 = arith.constant 6 : index
    %c0_94 = arith.constant 0 : index
    %126 = vector.load %arg6[%c1_92, %c6_93, %c0_94] : memref<3x9x256xf32, #tpu.memory_space<vmem>>, vector<1x1x256xf32>
    %127 = vector.shape_cast %126 : vector<1x1x256xf32> to vector<1x256xf32>
    %128 = vector.broadcast %127 : vector<1x256xf32> to vector<8x256xf32>
    %129 = arith.addf %125, %128 : vector<8x256xf32>
    %c1_95 = arith.constant 1 : index
    %c7_96 = arith.constant 7 : index
    %c0_97 = arith.constant 0 : index
    %130 = vector.load %arg6[%c1_95, %c7_96, %c0_97] : memref<3x9x256xf32, #tpu.memory_space<vmem>>, vector<1x1x256xf32>
    %131 = vector.shape_cast %130 : vector<1x1x256xf32> to vector<1x256xf32>
    %132 = arith.mulf %131, %112 : vector<1x256xf32>
    %133 = vector.broadcast %132 : vector<1x256xf32> to vector<8x256xf32>
    %134 = arith.addf %129, %133 : vector<8x256xf32>
    %cst_98 = arith.constant 0.000000e+00 : f32
    %135 = vector.broadcast %cst_98 : f32 to vector<8x256xf32>
    %136 = arith.maximumf %134, %135 : vector<8x256xf32>
    %c1_99 = arith.constant 1 : index
    %c3_100 = arith.constant 3 : index
    %c0_101 = arith.constant 0 : index
    %137 = vector.load %arg6[%c1_99, %c3_100, %c0_101] : memref<3x9x256xf32, #tpu.memory_space<vmem>>, vector<1x1x256xf32>
    %138 = vector.shape_cast %137 : vector<1x1x256xf32> to vector<1x256xf32>
    %c1_102 = arith.constant 1 : index
    %c8_103 = arith.constant 8 : index
    %c0_104 = arith.constant 0 : index
    %139 = vector.load %arg6[%c1_102, %c8_103, %c0_104] : memref<3x9x256xf32, #tpu.memory_space<vmem>>, vector<1x1x256xf32>
    %140 = vector.shape_cast %139 : vector<1x1x256xf32> to vector<1x256xf32>
    %141 = vector.extract_strided_slice %140 {offsets = [0, 0], sizes = [1, 1], strides = [1, 1]} : vector<1x256xf32> to vector<1x1xf32>
    %142 = vector.extract_strided_slice %140 {offsets = [0, 1], sizes = [1, 1], strides = [1, 1]} : vector<1x256xf32> to vector<1x1xf32>
    %143 = vector.extract_strided_slice %140 {offsets = [0, 2], sizes = [1, 1], strides = [1, 1]} : vector<1x256xf32> to vector<1x1xf32>
    %144 = arith.mulf %143, %141 : vector<1x1xf32>
    %145 = arith.addf %142, %144 : vector<1x1xf32>
    %c1_105 = arith.constant 1 : index
    %c0_106 = arith.constant 0 : index
    %c0_107 = arith.constant 0 : index
    %c0_108 = arith.constant 0 : index
    %146 = vector.load %arg4[%c1_105, %c0_106, %c0_107, %c0_108] : memref<3x2x1x256xbf16, #tpu.memory_space<vmem>>, vector<1x1x1x256xbf16>
    %147 = vector.shape_cast %146 : vector<1x1x1x256xbf16> to vector<1x256xbf16>
    %148 = arith.extf %147 : vector<1x256xbf16> to vector<1x256xf32>
    %c1_109 = arith.constant 1 : index
    %c1_110 = arith.constant 1 : index
    %c0_111 = arith.constant 0 : index
    %c0_112 = arith.constant 0 : index
    %149 = vector.load %arg4[%c1_109, %c1_110, %c0_111, %c0_112] : memref<3x2x1x256xbf16, #tpu.memory_space<vmem>>, vector<1x1x1x256xbf16>
    %150 = vector.shape_cast %149 : vector<1x1x1x256xbf16> to vector<1x256xbf16>
    %151 = arith.extf %150 : vector<1x256xbf16> to vector<1x256xf32>
    %152 = vector.broadcast %141 : vector<1x1xf32> to vector<1x256xf32>
    %153 = arith.mulf %138, %152 : vector<1x256xf32>
    %154 = arith.mulf %151, %153 : vector<1x256xf32>
    %155 = arith.addf %148, %154 : vector<1x256xf32>
    %156 = vector.broadcast %155 : vector<1x256xf32> to vector<8x256xf32>
    %157 = arith.mulf %136, %156 : vector<8x256xf32>
    %cst_113 = arith.constant dense<0.000000e+00> : vector<8xf32>
    %158 = vector.multi_reduction <add>, %157, %cst_113 [1] : vector<8x256xf32> to vector<8xf32>
    %159 = vector.shape_cast %158 : vector<8xf32> to vector<8x1xf32>
    %160 = vector.broadcast %145 : vector<1x1xf32> to vector<8x1xf32>
    %161 = arith.addf %159, %160 : vector<8x1xf32>
    %c2_114 = arith.constant 2 : index
    %c0_115 = arith.constant 0 : index
    %c0_116 = arith.constant 0 : index
    %162 = vector.load %arg5[%c2_114, %c0_115, %c0_116] : memref<3x1x20xf32, #tpu.memory_space<vmem>>, vector<1x1x20xf32>
    %163 = vector.shape_cast %162 : vector<1x1x20xf32> to vector<1x20xf32>
    %c2_117 = arith.constant 2 : index
    %c0_118 = arith.constant 0 : index
    %c0_119 = arith.constant 0 : index
    %164 = vector.load %arg6[%c2_117, %c0_118, %c0_119] : memref<3x9x256xf32, #tpu.memory_space<vmem>>, vector<1x1x256xf32>
    %165 = vector.shape_cast %164 : vector<1x1x256xf32> to vector<1x256xf32>
    %166 = vector.broadcast %163 : vector<1x20xf32> to vector<8x20xf32>
    %167 = arith.mulf %0, %166 : vector<8x20xf32>
    %168 = arith.truncf %167 : vector<8x20xf32> to vector<8x20xbf16>
    %c2_120 = arith.constant 2 : index
    %c0_121 = arith.constant 0 : index
    %c0_122 = arith.constant 0 : index
    %c0_123 = arith.constant 0 : index
    %169 = vector.load %arg2[%c2_120, %c0_121, %c0_122, %c0_123] : memref<3x2x20x256xbf16, #tpu.memory_space<vmem>>, vector<1x1x20x256xbf16>
    %170 = vector.shape_cast %169 : vector<1x1x20x256xbf16> to vector<20x256xbf16>
    %cst_124 = arith.constant dense<0.000000e+00> : vector<8x256xf32>
    %171 = tpu.matmul %1, %170, %cst_124 {dimension_numbers = #tpu.dot_dimension_numbers<[1], [0], [0], [1], [0, 0, 1, 1], [], []>} : vector<8x20xbf16>, vector<20x256xbf16>, vector<8x256xf32> -> vector<8x256xf32>
    %c2_125 = arith.constant 2 : index
    %c1_126 = arith.constant 1 : index
    %c0_127 = arith.constant 0 : index
    %c0_128 = arith.constant 0 : index
    %172 = vector.load %arg2[%c2_125, %c1_126, %c0_127, %c0_128] : memref<3x2x20x256xbf16, #tpu.memory_space<vmem>>, vector<1x1x20x256xbf16>
    %173 = vector.shape_cast %172 : vector<1x1x20x256xbf16> to vector<20x256xbf16>
    %cst_129 = arith.constant dense<0.000000e+00> : vector<8x256xf32>
    %174 = tpu.matmul %168, %173, %cst_129 {dimension_numbers = #tpu.dot_dimension_numbers<[1], [0], [0], [1], [0, 0, 1, 1], [], []>} : vector<8x20xbf16>, vector<20x256xbf16>, vector<8x256xf32> -> vector<8x256xf32>
    %175 = vector.broadcast %165 : vector<1x256xf32> to vector<8x256xf32>
    %176 = arith.mulf %174, %175 : vector<8x256xf32>
    %177 = arith.addf %171, %176 : vector<8x256xf32>
    %c2_130 = arith.constant 2 : index
    %c4_131 = arith.constant 4 : index
    %c0_132 = arith.constant 0 : index
    %178 = vector.load %arg6[%c2_130, %c4_131, %c0_132] : memref<3x9x256xf32, #tpu.memory_space<vmem>>, vector<1x1x256xf32>
    %179 = vector.shape_cast %178 : vector<1x1x256xf32> to vector<1x256xf32>
    %180 = vector.broadcast %179 : vector<1x256xf32> to vector<8x256xf32>
    %181 = arith.addf %177, %180 : vector<8x256xf32>
    %c2_133 = arith.constant 2 : index
    %c5_134 = arith.constant 5 : index
    %c0_135 = arith.constant 0 : index
    %182 = vector.load %arg6[%c2_133, %c5_134, %c0_135] : memref<3x9x256xf32, #tpu.memory_space<vmem>>, vector<1x1x256xf32>
    %183 = vector.shape_cast %182 : vector<1x1x256xf32> to vector<1x256xf32>
    %184 = arith.mulf %183, %165 : vector<1x256xf32>
    %185 = vector.broadcast %184 : vector<1x256xf32> to vector<8x256xf32>
    %186 = arith.addf %181, %185 : vector<8x256xf32>
    %cst_136 = arith.constant 0.000000e+00 : f32
    %187 = vector.broadcast %cst_136 : f32 to vector<8x256xf32>
    %188 = arith.maximumf %186, %187 : vector<8x256xf32>
    %c2_137 = arith.constant 2 : index
    %c1_138 = arith.constant 1 : index
    %c0_139 = arith.constant 0 : index
    %189 = vector.load %arg6[%c2_137, %c1_138, %c0_139] : memref<3x9x256xf32, #tpu.memory_space<vmem>>, vector<1x1x256xf32>
    %190 = vector.shape_cast %189 : vector<1x1x256xf32> to vector<1x256xf32>
    %c2_140 = arith.constant 2 : index
    %c2_141 = arith.constant 2 : index
    %c0_142 = arith.constant 0 : index
    %191 = vector.load %arg6[%c2_140, %c2_141, %c0_142] : memref<3x9x256xf32, #tpu.memory_space<vmem>>, vector<1x1x256xf32>
    %192 = vector.shape_cast %191 : vector<1x1x256xf32> to vector<1x256xf32>
    %193 = vector.broadcast %190 : vector<1x256xf32> to vector<8x256xf32>
    %194 = arith.mulf %188, %193 : vector<8x256xf32>
    %195 = arith.truncf %194 : vector<8x256xf32> to vector<8x256xbf16>
    %196 = arith.truncf %188 : vector<8x256xf32> to vector<8x256xbf16>
    %c2_143 = arith.constant 2 : index
    %c0_144 = arith.constant 0 : index
    %c0_145 = arith.constant 0 : index
    %c0_146 = arith.constant 0 : index
    %197 = vector.load %arg3[%c2_143, %c0_144, %c0_145, %c0_146] : memref<3x2x256x256xbf16, #tpu.memory_space<vmem>>, vector<1x1x256x256xbf16>
    %198 = vector.shape_cast %197 : vector<1x1x256x256xbf16> to vector<256x256xbf16>
    %cst_147 = arith.constant dense<0.000000e+00> : vector<8x256xf32>
    %199 = tpu.matmul %196, %198, %cst_147 {dimension_numbers = #tpu.dot_dimension_numbers<[1], [0], [0], [1], [0, 0, 1, 1], [], []>} : vector<8x256xbf16>, vector<256x256xbf16>, vector<8x256xf32> -> vector<8x256xf32>
    %c2_148 = arith.constant 2 : index
    %c1_149 = arith.constant 1 : index
    %c0_150 = arith.constant 0 : index
    %c0_151 = arith.constant 0 : index
    %200 = vector.load %arg3[%c2_148, %c1_149, %c0_150, %c0_151] : memref<3x2x256x256xbf16, #tpu.memory_space<vmem>>, vector<1x1x256x256xbf16>
    %201 = vector.shape_cast %200 : vector<1x1x256x256xbf16> to vector<256x256xbf16>
    %cst_152 = arith.constant dense<0.000000e+00> : vector<8x256xf32>
    %202 = tpu.matmul %195, %201, %cst_152 {dimension_numbers = #tpu.dot_dimension_numbers<[1], [0], [0], [1], [0, 0, 1, 1], [], []>} : vector<8x256xbf16>, vector<256x256xbf16>, vector<8x256xf32> -> vector<8x256xf32>
    %203 = vector.broadcast %192 : vector<1x256xf32> to vector<8x256xf32>
    %204 = arith.mulf %202, %203 : vector<8x256xf32>
    %205 = arith.addf %199, %204 : vector<8x256xf32>
    %c2_153 = arith.constant 2 : index
    %c6_154 = arith.constant 6 : index
    %c0_155 = arith.constant 0 : index
    %206 = vector.load %arg6[%c2_153, %c6_154, %c0_155] : memref<3x9x256xf32, #tpu.memory_space<vmem>>, vector<1x1x256xf32>
    %207 = vector.shape_cast %206 : vector<1x1x256xf32> to vector<1x256xf32>
    %208 = vector.broadcast %207 : vector<1x256xf32> to vector<8x256xf32>
    %209 = arith.addf %205, %208 : vector<8x256xf32>
    %c2_156 = arith.constant 2 : index
    %c7_157 = arith.constant 7 : index
    %c0_158 = arith.constant 0 : index
    %210 = vector.load %arg6[%c2_156, %c7_157, %c0_158] : memref<3x9x256xf32, #tpu.memory_space<vmem>>, vector<1x1x256xf32>
    %211 = vector.shape_cast %210 : vector<1x1x256xf32> to vector<1x256xf32>
    %212 = arith.mulf %211, %192 : vector<1x256xf32>
    %213 = vector.broadcast %212 : vector<1x256xf32> to vector<8x256xf32>
    %214 = arith.addf %209, %213 : vector<8x256xf32>
    %cst_159 = arith.constant 0.000000e+00 : f32
    %215 = vector.broadcast %cst_159 : f32 to vector<8x256xf32>
    %216 = arith.maximumf %214, %215 : vector<8x256xf32>
    %c2_160 = arith.constant 2 : index
    %c3_161 = arith.constant 3 : index
    %c0_162 = arith.constant 0 : index
    %217 = vector.load %arg6[%c2_160, %c3_161, %c0_162] : memref<3x9x256xf32, #tpu.memory_space<vmem>>, vector<1x1x256xf32>
    %218 = vector.shape_cast %217 : vector<1x1x256xf32> to vector<1x256xf32>
    %c2_163 = arith.constant 2 : index
    %c8_164 = arith.constant 8 : index
    %c0_165 = arith.constant 0 : index
    %219 = vector.load %arg6[%c2_163, %c8_164, %c0_165] : memref<3x9x256xf32, #tpu.memory_space<vmem>>, vector<1x1x256xf32>
    %220 = vector.shape_cast %219 : vector<1x1x256xf32> to vector<1x256xf32>
    %221 = vector.extract_strided_slice %220 {offsets = [0, 0], sizes = [1, 1], strides = [1, 1]} : vector<1x256xf32> to vector<1x1xf32>
    %222 = vector.extract_strided_slice %220 {offsets = [0, 1], sizes = [1, 1], strides = [1, 1]} : vector<1x256xf32> to vector<1x1xf32>
    %223 = vector.extract_strided_slice %220 {offsets = [0, 2], sizes = [1, 1], strides = [1, 1]} : vector<1x256xf32> to vector<1x1xf32>
    %224 = arith.mulf %223, %221 : vector<1x1xf32>
    %225 = arith.addf %222, %224 : vector<1x1xf32>
    %c2_166 = arith.constant 2 : index
    %c0_167 = arith.constant 0 : index
    %c0_168 = arith.constant 0 : index
    %c0_169 = arith.constant 0 : index
    %226 = vector.load %arg4[%c2_166, %c0_167, %c0_168, %c0_169] : memref<3x2x1x256xbf16, #tpu.memory_space<vmem>>, vector<1x1x1x256xbf16>
    %227 = vector.shape_cast %226 : vector<1x1x1x256xbf16> to vector<1x256xbf16>
    %228 = arith.extf %227 : vector<1x256xbf16> to vector<1x256xf32>
    %c2_170 = arith.constant 2 : index
    %c1_171 = arith.constant 1 : index
    %c0_172 = arith.constant 0 : index
    %c0_173 = arith.constant 0 : index
    %229 = vector.load %arg4[%c2_170, %c1_171, %c0_172, %c0_173] : memref<3x2x1x256xbf16, #tpu.memory_space<vmem>>, vector<1x1x1x256xbf16>
    %230 = vector.shape_cast %229 : vector<1x1x1x256xbf16> to vector<1x256xbf16>
    %231 = arith.extf %230 : vector<1x256xbf16> to vector<1x256xf32>
    %232 = vector.broadcast %221 : vector<1x1xf32> to vector<1x256xf32>
    %233 = arith.mulf %218, %232 : vector<1x256xf32>
    %234 = arith.mulf %231, %233 : vector<1x256xf32>
    %235 = arith.addf %228, %234 : vector<1x256xf32>
    %236 = vector.broadcast %235 : vector<1x256xf32> to vector<8x256xf32>
    %237 = arith.mulf %216, %236 : vector<8x256xf32>
    %cst_174 = arith.constant dense<0.000000e+00> : vector<8xf32>
    %238 = vector.multi_reduction <add>, %237, %cst_174 [1] : vector<8x256xf32> to vector<8xf32>
    %239 = vector.shape_cast %238 : vector<8xf32> to vector<8x1xf32>
    %240 = vector.broadcast %225 : vector<1x1xf32> to vector<8x1xf32>
    %241 = arith.addf %239, %240 : vector<8x1xf32>
    %242 = tpu.concatenate %81, %161, %241 in 1 : vector<8x1xf32>, vector<8x1xf32>, vector<8x1xf32> -> vector<8x3xf32>
    %c0_175 = arith.constant 0 : index
    %c0_176 = arith.constant 0 : index
    %c0_177 = arith.constant 0 : index
    %243 = vector.load %arg7[%c0_175, %c0_176, %c0_177] : memref<1x8x3xf32, #tpu.memory_space<vmem>>, vector<1x8x3xf32>
    %244 = vector.shape_cast %243 : vector<1x8x3xf32> to vector<8x3xf32>
    %245 = vector.shape_cast %242 : vector<8x3xf32> to vector<1x8x3xf32>
    tpu.vector_store %arg7[%c0_175, %c0_176, %c0_177], %245 {strides = array<i32>} : memref<1x8x3xf32, #tpu.memory_space<vmem>>, vector<1x8x3xf32>,
    return
  }
  func.func @transform_0(%arg0: i32) -> (i32, i32) {
    %c0_i32 = arith.constant 0 : i32
    %c0_i32_0 = arith.constant 0 : i32
    %c0_i32_1 = arith.constant 0 : i32
    return %c0_i32, %c0_i32_0 : i32, i32
  }
  func.func @transform_1(%arg0: i32) -> (i32, i32, i32, i32) {
    %c0_i32 = arith.constant 0 : i32
    %c0_i32_0 = arith.constant 0 : i32
    %c0_i32_1 = arith.constant 0 : i32
    %c0_i32_2 = arith.constant 0 : i32
    return %arg0, %c0_i32, %c0_i32_0, %c0_i32_1 : i32, i32, i32, i32
  }
  func.func @transform_2(%arg0: i32) -> (i32, i32, i32, i32) {
    %c0_i32 = arith.constant 0 : i32
    %c0_i32_0 = arith.constant 0 : i32
    %c0_i32_1 = arith.constant 0 : i32
    %c0_i32_2 = arith.constant 0 : i32
    return %arg0, %c0_i32, %c0_i32_0, %c0_i32_1 : i32, i32, i32, i32
  }
  func.func @transform_3(%arg0: i32) -> (i32, i32, i32, i32) {
    %c0_i32 = arith.constant 0 : i32
    %c0_i32_0 = arith.constant 0 : i32
    %c0_i32_1 = arith.constant 0 : i32
    %c0_i32_2 = arith.constant 0 : i32
    return %arg0, %c0_i32, %c0_i32_0, %c0_i32_1 : i32, i32, i32, i32
  }
  func.func @transform_4(%arg0: i32) -> (i32, i32, i32) {
    %c0_i32 = arith.constant 0 : i32
    %c0_i32_0 = arith.constant 0 : i32
    %c0_i32_1 = arith.constant 0 : i32
    return %arg0, %c0_i32, %c0_i32_0 : i32, i32, i32
  }
  func.func @transform_5(%arg0: i32) -> (i32, i32, i32) {
    %c0_i32 = arith.constant 0 : i32
    %c0_i32_0 = arith.constant 0 : i32
    %c0_i32_1 = arith.constant 0 : i32
    return %arg0, %c0_i32, %c0_i32_0 : i32, i32, i32
  }
  func.func @transform_6(%arg0: i32) -> (i32, i32, i32) {
    %c0_i32 = arith.constant 0 : i32
    %c0_i32_0 = arith.constant 0 : i32
    %c0_i32_1 = arith.constant 0 : i32
    return %arg0, %c0_i32, %c0_i32_0 : i32, i32, i32
  }
}

</mosaic_0001>

<llo_original>
// kernel: tpu_custom_call.1
$region0: #{tpu_custom_call.1}
  #allocation0 [shape = 'u32[]', space=smem, size = 0x4, offset = 0x4, fixed_abs, tag = 'smem constant byte address 0x4 - core index']
  #allocation1 [shape = 'u32[144,128]{1,0:T(1,128)}', space=vmem, size = 0x12000, scoped, tag = 'internal scratch']
  %s0 = inlined_call_operand.hbm [shape: f32[8,20], index: 0, kind: input, shape index: {}]
  %s1 = inlined_call_operand.vmem [shape: bf16[6,2,20,256], index: 1, kind: input, shape index: {}]
  %s2 = inlined_call_operand.hbm [shape: bf16[6,2,256,256], index: 2, kind: input, shape index: {}]
  %s3 = inlined_call_operand.vmem [shape: bf16[6,2,1,256], index: 3, kind: input, shape index: {}]
  %s4 = inlined_call_operand.hbm [shape: f32[6,1,20], index: 4, kind: input, shape index: {}]
  %s5 = inlined_call_operand.vmem [shape: f32[6,9,256], index: 5, kind: input, shape index: {}]
  %s6 = inlined_call_operand.vmem [shape: f32[2,8,3], index: 6, kind: output, shape index: {}]
  %s7 = sld [smem:[#allocation0]]
  $region69: #{tpu_custom_call.1} parent=0
    _
  %s9 = ssub.s32 1, %s7
  %s10 = scalar_select 0, %s9, %s7
  $region1: #{tpu_custom_call.1} parent=0
    #allocation2 [shape = 'u8[4096]{0}', space=vmem, size = 0x1000, scoped, tag = 'input window, operand 0, single buffered']
    #allocation3 [shape = 's32[2]{0}', space=sflag, size = 0x8, scoped, tag = 'scoped memory for tpu_custom_call.1']
    #allocation4 [shape = 'u8[1572864]{0}', space=vmem, size = 0x180000, scoped, tag = 'input window, operand 2']
    #allocation5 [shape = 's32[2]{0}', space=sflag, size = 0x8, scoped, tag = 'scoped memory for tpu_custom_call.1']
    #allocation6 [shape = 'u8[3072]{0}', space=vmem, size = 0xc00, scoped, tag = 'input window, operand 4']
    %11 = vsyncpa [#allocation3], 0
    %12 = vsyncpa [#allocation5], 0
    %s13 = scalar_lea.sflag [#allocation5], 1
    %14 = vsyncpa %s13, 0
    loop: start=0, step=1, limit=4
    $region2: #{tpu_custom_call.1} parent=1 // loop_pre_header
      _
    $region3: #{tpu_custom_call.1} parent=1 // loop_header
      %s16 = sphi 0, %s20
      %p17 = scmp.ge.s32.totalorder %s16, 4
      %s24 = sphi 0, %s24
      %s26 = sphi 0, %s24
      %s27 = sphi 0, %s26
      %s41 = sphi 0, %s27
      %s47 = sphi 0, %s49
      %s50 = sphi 0, %s47
      %s51 = sphi 0, %s50
      %s67 = sphi 0, %s51
      %s73 = sphi 0, %s75
      %s76 = sphi 0, %s73
      %s77 = sphi 0, %s76
      %s93 = sphi 0, %s77
      %s99 = sphi 0, %s101
      %s102 = sphi 0, %s99
      %s103 = sphi 0, %s102
      %s119 = sphi 0, %s103
      %s125 = sphi 0, %s127
      %s128 = sphi 0, %s125
      %s129 = sphi 0, %s128
      %s145 = sphi 0, %s129
      %s151 = sphi 0, %s153
      %s154 = sphi 0, %s151
      %s155 = sphi 0, %s154
      %s171 = sphi 0, %s155
      %s177 = sphi 0, %s179
      %s180 = sphi 0, %s177
      %s181 = sphi 0, %s180
      %s197 = sphi 0, %s181
    $region4: #{tpu_custom_call.1} parent=1 // loop_header_branch
      %19 = sbr.rel (%p17) target = $region8
    $region5: #{tpu_custom_call.1} parent=1 // loop_body
      %s21 = ssub.s32 %s16, 1
      %s22 = ssub.s32 %s16, 2
      %s23 = sadd.s32 %s16, 1
      %s25 = sadd.s32 %s24, 1
      %p28 = scmp.eq.s32.totalorder %s16, 1
      %p29 = scmp.ne.s32.totalorder %s24, %s26
      %p30 = scmp.eq.s32.totalorder %s16, 0
      %p31 = por %p29, %p30
      %p32 = scmp.ne.s32.totalorder %s24, %s26
      %p33 = scmp.eq.s32.totalorder %s21, 1
      %p34 = por %p32, %p33
      %p35 = scmp.ne.s32.totalorder %s26, %s27
      %p36 = scmp.eq.s32.totalorder %s21, 0
      %p37 = por %p35, %p36
      %p38 = scmp.ne.s32.totalorder %s26, %s27
      %p39 = scmp.eq.s32.totalorder %s22, 1
      %p40 = por %p38, %p39
      %p42 = scmp.ne.s32.totalorder %s27, %s41
      %p43 = scmp.eq.s32.totalorder %s22, 0
      %p44 = por %p42, %p43
      %s45 = ssub.s32 %s16, %s23
      %p46 = scmp.eq.s32.totalorder %s45, 0
      %s48 = sadd.s32 %s47, 1
      %s49 = scalar_select %p46, %s47, %s48
      %p52 = pneg %p46
      %p53 = scmp.eq.s32.totalorder %s16, 1
      %p54 = por %p52, %p53
      %p55 = scmp.ne.s32.totalorder %s47, %s50
      %p56 = scmp.eq.s32.totalorder %s16, 0
      %p57 = por %p55, %p56
      %p58 = scmp.ne.s32.totalorder %s47, %s50
      %p59 = scmp.eq.s32.totalorder %s21, 1
      %p60 = por %p58, %p59
      %p61 = scmp.ne.s32.totalorder %s50, %s51
      %p62 = scmp.eq.s32.totalorder %s21, 0
      %p63 = por %p61, %p62
      %p64 = scmp.ne.s32.totalorder %s50, %s51
      %p65 = scmp.eq.s32.totalorder %s22, 1
      %p66 = por %p64, %p65
      %p68 = scmp.ne.s32.totalorder %s51, %s67
      %p69 = scmp.eq.s32.totalorder %s22, 0
      %p70 = por %p68, %p69
      %s71 = ssub.s32 %s16, %s23
      %p72 = scmp.eq.s32.totalorder %s71, 0
      %s74 = sadd.s32 %s73, 1
      %s75 = scalar_select %p72, %s73, %s74
      %p78 = pneg %p72
      %p79 = scmp.eq.s32.totalorder %s16, 1
      %p80 = por %p78, %p79
      %p81 = scmp.ne.s32.totalorder %s73, %s76
      %p82 = scmp.eq.s32.totalorder %s16, 0
      %p83 = por %p81, %p82
      %p84 = scmp.ne.s32.totalorder %s73, %s76
      %p85 = scmp.eq.s32.totalorder %s21, 1
      %p86 = por %p84, %p85
      %p87 = scmp.ne.s32.totalorder %s76, %s77
      %p88 = scmp.eq.s32.totalorder %s21, 0
      %p89 = por %p87, %p88
      %p90 = scmp.ne.s32.totalorder %s76, %s77
      %p91 = scmp.eq.s32.totalorder %s22, 1
      %p92 = por %p90, %p91
      %p94 = scmp.ne.s32.totalorder %s77, %s93
      %p95 = scmp.eq.s32.totalorder %s22, 0
      %p96 = por %p94, %p95
      %s97 = ssub.s32 %s16, %s23
      %p98 = scmp.eq.s32.totalorder %s97, 0
      %s100 = sadd.s32 %s99, 1
      %s101 = scalar_select %p98, %s99, %s100
      %p104 = pneg %p98
      %p105 = scmp.eq.s32.totalorder %s16, 1
      %p106 = por %p104, %p105
      %p107 = scmp.ne.s32.totalorder %s99, %s102
      %p108 = scmp.eq.s32.totalorder %s16, 0
      %p109 = por %p107, %p108
      %p110 = scmp.ne.s32.totalorder %s99, %s102
      %p111 = scmp.eq.s32.totalorder %s21, 1
      %p112 = por %p110, %p111
      %p113 = scmp.ne.s32.totalorder %s102, %s103
      %p114 = scmp.eq.s32.totalorder %s21, 0
      %p115 = por %p113, %p114
      %p116 = scmp.ne.s32.totalorder %s102, %s103
      %p117 = scmp.eq.s32.totalorder %s22, 1
      %p118 = por %p116, %p117
      %p120 = scmp.ne.s32.totalorder %s103, %s119
      %p121 = scmp.eq.s32.totalorder %s22, 0
      %p122 = por %p120, %p121
      %s123 = ssub.s32 %s16, %s23
      %p124 = scmp.eq.s32.totalorder %s123, 0
      %s126 = sadd.s32 %s125, 1
      %s127 = scalar_select %p124, %s125, %s126
      %p130 = pneg %p124
      %p131 = scmp.eq.s32.totalorder %s16, 1
      %p132 = por %p130, %p131
      %p133 = scmp.ne.s32.totalorder %s125, %s128
      %p134 = scmp.eq.s32.totalorder %s16, 0
      %p135 = por %p133, %p134
      %p136 = scmp.ne.s32.totalorder %s125, %s128
      %p137 = scmp.eq.s32.totalorder %s21, 1
      %p138 = por %p136, %p137
      %p139 = scmp.ne.s32.totalorder %s128, %s129
      %p140 = scmp.eq.s32.totalorder %s21, 0
      %p141 = por %p139, %p140
      %p142 = scmp.ne.s32.totalorder %s128, %s129
      %p143 = scmp.eq.s32.totalorder %s22, 1
      %p144 = por %p142, %p143
      %p146 = scmp.ne.s32.totalorder %s129, %s145
      %p147 = scmp.eq.s32.totalorder %s22, 0
      %p148 = por %p146, %p147
      %s149 = ssub.s32 %s16, %s23
      %p150 = scmp.eq.s32.totalorder %s149, 0
      %s152 = sadd.s32 %s151, 1
      %s153 = scalar_select %p150, %s151, %s152
      %p156 = pneg %p150
      %p157 = scmp.eq.s32.totalorder %s16, 1
      %p158 = por %p156, %p157
      %p159 = scmp.ne.s32.totalorder %s151, %s154
      %p160 = scmp.eq.s32.totalorder %s16, 0
      %p161 = por %p159, %p160
      %p162 = scmp.ne.s32.totalorder %s151, %s154
      %p163 = scmp.eq.s32.totalorder %s21, 1
      %p164 = por %p162, %p163
      %p165 = scmp.ne.s32.totalorder %s154, %s155
      %p166 = scmp.eq.s32.totalorder %s21, 0
      %p167 = por %p165, %p166
      %p168 = scmp.ne.s32.totalorder %s154, %s155
      %p169 = scmp.eq.s32.totalorder %s22, 1
      %p170 = por %p168, %p169
      %p172 = scmp.ne.s32.totalorder %s155, %s171
      %p173 = scmp.eq.s32.totalorder %s22, 0
      %p174 = por %p172, %p173
      %s175 = ssub.s32 %s16, %s23
      %p176 = scmp.eq.s32.totalorder %s175, 0
      %s178 = sadd.s32 %s177, 1
      %s179 = scalar_select %p176, %s177, %s178
      %p182 = pneg %p176
      %p183 = scmp.eq.s32.totalorder %s16, 1
      %p184 = por %p182, %p183
      %p185 = scmp.ne.s32.totalorder %s177, %s180
      %p186 = scmp.eq.s32.totalorder %s16, 0
      %p187 = por %p185, %p186
      %p188 = scmp.ne.s32.totalorder %s177, %s180
      %p189 = scmp.eq.s32.totalorder %s21, 1
      %p190 = por %p188, %p189
      %p191 = scmp.ne.s32.totalorder %s180, %s181
      %p192 = scmp.eq.s32.totalorder %s21, 0
      %p193 = por %p191, %p192
      %p194 = scmp.ne.s32.totalorder %s180, %s181
      %p195 = scmp.eq.s32.totalorder %s22, 1
      %p196 = por %p194, %p195
      %p198 = scmp.ne.s32.totalorder %s181, %s197
      %p199 = scmp.eq.s32.totalorder %s22, 0
      %p200 = por %p198, %p199
      %p201 = scmp.le.s32.totalorder 1, %s16
      %p202 = scmp.lt.s32.totalorder %s16, 3
      %p203 = pnand %p201, %p202
      %p204 = pneg %p203
      // Predicated region
      $region9: #{tpu_custom_call.1} parent=5 // pred_check
        _
      $region10: #{tpu_custom_call.1} parent=5 // pred_check_branch
        %206 = sbr.rel (%p203) target = $region12
      $region11: #{tpu_custom_call.1} parent=5 // pred_region
        %s207 = ssub.s32 %s16, 1
        // Predicated region
        $region13: #{tpu_custom_call.1} parent=11 // pred_check
          %p208 = pneg %p37
        $region14: #{tpu_custom_call.1} parent=11 // pred_check_branch
          %210 = sbr.rel (%p208) target = $region16
        $region15: #{tpu_custom_call.1} parent=11 // pred_region
          %s212 = ssub.s32 128, 128
          %213 = vsyncadd [#allocation3], %s212
          %s215 = sshll.u32 [#allocation2], 4
          %s216 = int_to_ptr.vmem [resolvable:$true] %s215
          %218 = dma.hbm_to_vmem [thread:$0]  %s0, 128, %s216, [#allocation3]
        $region16: #{tpu_custom_call.1} parent=11 // pred_fallthru
          _
      $region12: #{tpu_custom_call.1} parent=5 // pred_fallthru
        _
      %p219 = scmp.lt.s32.totalorder %s16, 2
      // Predicated region
      $region17: #{tpu_custom_call.1} parent=5 // pred_check
        %p220 = pneg %p219
      $region18: #{tpu_custom_call.1} parent=5 // pred_check_branch
        %222 = sbr.rel (%p220) target = $region20
      $region19: #{tpu_custom_call.1} parent=5 // pred_region
        // Predicated region
        $region21: #{tpu_custom_call.1} parent=19 // pred_check
          %p223 = pneg %p57
        $region22: #{tpu_custom_call.1} parent=19 // pred_check_branch
          %225 = sbr.rel (%p223) target = $region24
        $region23: #{tpu_custom_call.1} parent=19 // pred_region
          %s226 = smul.u32 3, %s16
          %p227 = scmp.lt.s32.totalorder %s226, 5
          %s228 = scalar_select %p227, %s226, 5
          %s229 = smul.addr %s228, 12
          %s230 = smul.addr %s229, 4
          %s231 = scalar_lea.vmem %s1, %s230
          %s232 = smul.u32 3, %s16
        $region24: #{tpu_custom_call.1} parent=19 // pred_fallthru
          _
        // Predicated region
        $region25: #{tpu_custom_call.1} parent=19 // pred_check
          %p233 = pneg %p83
        $region26: #{tpu_custom_call.1} parent=19 // pred_check_branch
          %235 = sbr.rel (%p233) target = $region28
        $region27: #{tpu_custom_call.1} parent=19 // pred_region
          %s236 = sand.u32 %s16, 1
          %s237 = scalar_lea.sflag [#allocation5], %s236
          %s238 = sand.u32 %s73, 1
          %s239 = smul.addr %s238, 1536
          %s240 = scalar_lea.vmem [#allocation4], %s239
          %s241 = smul.u32 3, %s16
          %s243 = ssub.s32 24576, 24576
          %244 = vsyncadd %s237, %s243
          %s245 = smul.addr %s241, 128
          %s246 = smul.addr %s245, 64
          %s247 = scalar_lea.hbm %s2, %s246
          %s248 = sshll.u32 %s240, 4
          %s249 = int_to_ptr.vmem [resolvable:$true] %s248
          %254 = dma.hbm_to_vmem [thread:$0]  %s247, 24576, %s249, %s237, 128, 128, 8
        $region28: #{tpu_custom_call.1} parent=19 // pred_fallthru
          _
        // Predicated region
        $region29: #{tpu_custom_call.1} parent=19 // pred_check
          %p255 = pneg %p109
        $region30: #{tpu_custom_call.1} parent=19 // pred_check_branch
          %257 = sbr.rel (%p255) target = $region32
        $region31: #{tpu_custom_call.1} parent=19 // pred_region
          %s258 = smul.u32 3, %s16
          %p259 = scmp.lt.s32.totalorder %s258, 5
          %s260 = scalar_select %p259, %s258, 5
          %s261 = smul.addr %s260, 4
          %s262 = scalar_lea.vmem %s3, %s261
          %s263 = smul.u32 3, %s16
        $region32: #{tpu_custom_call.1} parent=19 // pred_fallthru
          _
        // Predicated region
        $region33: #{tpu_custom_call.1} parent=19 // pred_check
          %p264 = pneg %p135
        $region34: #{tpu_custom_call.1} parent=19 // pred_check_branch
          %266 = sbr.rel (%p264) target = $region36
        $region35: #{tpu_custom_call.1} parent=19 // pred_region
          %s267 = sand.u32 %s16, 1
          %s268 = scalar_lea.sflag [#allocation5], %s267
          %s269 = sand.u32 %s125, 1
          %s270 = smul.addr %s269, 3
          %s271 = scalar_lea.vmem [#allocation6], %s270
          %s272 = smul.u32 3, %s16
          %s274 = ssub.s32 48, 48
          %275 = vsyncadd %s268, %s274
          %s276 = smul.addr %s272, 16
          %s277 = scalar_lea.hbm %s4, %s276
          %s278 = sshll.u32 %s271, 4
          %s279 = int_to_ptr.vmem [resolvable:$true] %s278
          %284 = dma.hbm_to_vmem [thread:$0]  %s277, 48, %s279, %s268, 16, 16, 1
        $region36: #{tpu_custom_call.1} parent=19 // pred_fallthru
          _
        // Predicated region
        $region37: #{tpu_custom_call.1} parent=19 // pred_check
          %p285 = pneg %p161
        $region38: #{tpu_custom_call.1} parent=19 // pred_check_branch
          %287 = sbr.rel (%p285) target = $region40
        $region39: #{tpu_custom_call.1} parent=19 // pred_region
          %s288 = smul.u32 3, %s16
          %p289 = scmp.lt.s32.totalorder %s288, 5
          %s290 = scalar_select %p289, %s288, 5
          %s291 = smul.addr %s290, 4
          %s292 = smul.addr %s291, 8
          %s293 = scalar_lea.vmem %s5, %s292
          %s294 = smul.u32 3, %s16
        $region40: #{tpu_custom_call.1} parent=19 // pred_fallthru
          _
      $region20: #{tpu_custom_call.1} parent=5 // pred_fallthru
        _
      %p295 = scmp.le.s32.totalorder 1, %s16
      %p296 = scmp.lt.s32.totalorder %s16, 3
      %p297 = pnand %p295, %p296
      %p298 = pneg %p297
      // Predicated region
      $region41: #{tpu_custom_call.1} parent=5 // pred_check
        _
      $region42: #{tpu_custom_call.1} parent=5 // pred_check_branch
        %300 = sbr.rel (%p297) target = $region44
      $region43: #{tpu_custom_call.1} parent=5 // pred_region
        %s301 = ssub.s32 %s16, 1
        // Predicated region
        $region45: #{tpu_custom_call.1} parent=43 // pred_check
          %p302 = pneg %p37
        $region46: #{tpu_custom_call.1} parent=43 // pred_check_branch
          %304 = sbr.rel (%p302) target = $region48
        $region47: #{tpu_custom_call.1} parent=43 // pred_region
          %305 = dma.done [#allocation3], 128
        $region48: #{tpu_custom_call.1} parent=43 // pred_fallthru
          _
        %s306 = sand.u32 %s21, 1
        %s307 = scalar_lea.sflag [#allocation5], %s306
        %s308 = sand.u32 %s76, 1
        %s309 = smul.addr %s308, 1536
        %s310 = scalar_lea.vmem [#allocation4], %s309
        // Predicated region
        $region49: #{tpu_custom_call.1} parent=43 // pred_check
          %p311 = pneg %p89
        $region50: #{tpu_custom_call.1} parent=43 // pred_check_branch
          %313 = sbr.rel (%p311) target = $region52
        $region51: #{tpu_custom_call.1} parent=43 // pred_region
          %314 = dma.done %s307, 24576
        $region52: #{tpu_custom_call.1} parent=43 // pred_fallthru
          _
        %s315 = sand.u32 %s21, 1
        %s316 = scalar_lea.sflag [#allocation5], %s315
        %s317 = sand.u32 %s128, 1
        %s318 = smul.addr %s317, 3
        %s319 = scalar_lea.vmem [#allocation6], %s318
        // Predicated region
        $region53: #{tpu_custom_call.1} parent=43 // pred_check
          %p320 = pneg %p141
        $region54: #{tpu_custom_call.1} parent=43 // pred_check_branch
          %322 = sbr.rel (%p320) target = $region56
        $region55: #{tpu_custom_call.1} parent=43 // pred_region
          %323 = dma.done %s316, 48
        $region56: #{tpu_custom_call.1} parent=43 // pred_fallthru
          _
        %p324 = pneg %p37
        %p325 = pneg %p34
        %s326 = smul.u32 3, %s21
        %p327 = scmp.lt.s32.totalorder %s326, 5
        %s328 = scalar_select %p327, %s326, 5
        %s329 = smul.addr %s328, 12
        %s330 = smul.addr %s329, 4
        %s331 = scalar_lea.vmem %s1, %s330
        %p332 = pneg %p63
        %p333 = pneg %p60
        %s334 = sand.u32 %s21, 1
        %s335 = scalar_lea.sflag [#allocation5], %s334
        %s336 = sand.u32 %s76, 1
        %s337 = smul.addr %s336, 1536
        %s338 = scalar_lea.vmem [#allocation4], %s337
        %p339 = pneg %p89
        %p340 = pneg %p86
        %s341 = smul.u32 3, %s21
        %p342 = scmp.lt.s32.totalorder %s341, 5
        %s343 = scalar_select %p342, %s341, 5
        %s344 = smul.addr %s343, 4
        %s345 = scalar_lea.vmem %s3, %s344
        %p346 = pneg %p115
        %p347 = pneg %p112
        %s348 = sand.u32 %s21, 1
        %s349 = scalar_lea.sflag [#allocation5], %s348
        %s350 = sand.u32 %s128, 1
        %s351 = smul.addr %s350, 3
        %s352 = scalar_lea.vmem [#allocation6], %s351
        %p353 = pneg %p141
        %p354 = pneg %p138
        %s355 = smul.u32 3, %s21
        %p356 = scmp.lt.s32.totalorder %s355, 5
        %s357 = scalar_select %p356, %s355, 5
        %s358 = smul.addr %s357, 4
        %s359 = smul.addr %s358, 8
        %s360 = scalar_lea.vmem %s5, %s359
        %p361 = pneg %p167
        %p362 = pneg %p164
        %p363 = pneg %p193
        %p364 = pneg %p190
        %p365 = scmp.lt.s32.totalorder %s21, 1
        %s366 = scalar_select %p365, %s21, 1
        %s367 = smul.addr %s366, 8
        %s368 = scalar_lea.vmem %s6, %s367
        %s369 = smul.u32 3, %s21
        %p370 = scmp.lt.s32.totalorder %s369, 5
        %s371 = scalar_select %p370, %s369, 5
        %s372 = smul.addr %s371, 12
        %s373 = smul.addr %s372, 4
        %s374 = scalar_lea.vmem %s1, %s373
        %s375 = smul.u32 3, %s21
        %s376 = smul.u32 3, %s21
        %s377 = smul.u32 3, %s21
        %p378 = scmp.lt.s32.totalorder %s377, 5
        %s379 = scalar_select %p378, %s377, 5
        %s380 = smul.addr %s379, 4
        %s381 = scalar_lea.vmem %s3, %s380
        %s382 = smul.u32 3, %s21
        %s383 = smul.u32 3, %s21
        %s384 = smul.u32 3, %s21
        %p385 = scmp.lt.s32.totalorder %s384, 5
        %s386 = scalar_select %p385, %s384, 5
        %s387 = smul.addr %s386, 4
        %s388 = smul.addr %s387, 8
        %s389 = scalar_lea.vmem %s5, %s388
        %s390 = smul.u32 3, %s21
        %p391 = scmp.lt.s32.totalorder %s21, 1
        %s392 = scalar_select %p391, %s21, 1
        %s393 = smul.addr %s392, 8
        %s394 = scalar_lea.vmem %s6, %s393
        %v396 = vld [vmem:[#allocation2] sm:$0xff]
        %v397 = vpack.c.bf16 %v396, %v396
        %v398 = vld [vmem:[%s319] sm:$0x1]
        %v399 = vld [vmem:[%s389] ss:$8 sm:$0x3]
        %v401 = vlaneseq
        %v402 = vshrl.u32 %v401, 7
        %v403 = vsub.s32 0, %v402
        %v404 = vrot.slane %v398, %v403
        %v406 = vmul.f32 %v396, %v404
        %v407 = vpack.c.bf16 %v406, %v406
        %v408 = vld [vmem:[%s374] sm:$0xff]
        %v409 = vld [vmem:[%s374 + $0x8] sm:$0xff]
        %v410 = vld [vmem:[%s374 + $0x10] sm:$0x33]
        %s411 = scalar_lea.vmem %s374, 24
        %v412 = vld [vmem:[%s411] sm:$0xff]
        %v413 = vld [vmem:[%s411 + $0x8] sm:$0xff]
        %v414 = vld [vmem:[%s411 + $0x10] sm:$0x33]
        %v418 = vunpack.c.l.b16 %v412
        %v419 = vunpack.c.h.b16 %v412
        %v420 = vunpack.c.l.b16 %v413
        %v421 = vunpack.c.h.b16 %v413
        %v422 = vunpack.c.l.b16 %v414
        %v423 = vunpack.c.h.b16 %v414
        %v424 = vpack.c.b16 %v420, %v418
        %v425 = vpack.c.b16 %v421, %v419
        %v426 = vpack.c.b16 %v422, %v422
        %v427 = vpack.c.b16 %v423, %v423
        %vm430 = vcmask 162816
        %v432 = vsel %vm430, %v407, 0
        %vm434 = vcmask 1041408
        %v436 = vsel %vm434, %v426, 0
        %v439 = vsel %vm434, %v427, 0
        %441 = vmatprep.subr.bf16.mxu0 0
        %442 = vmatpush1.bf16.msra.mxu0 0
        %443 = vmatprep.subr.bf16.mxu0 0
        %444 = vmatpush1.bf16.msra.mxu0 0
        %445 = vmatprep.subr.bf16.mxu0 0
        %446 = vmatpush1.bf16.msra.mxu0 0
        %447 = vmatprep.subr.bf16.mxu0 0
        %448 = vmatpush1.bf16.msra.mxu0 0
        %449 = vmatprep.subr.bf16.mxu0 0
        %450 = vmatpush1.bf16.msra.mxu0 0
        %451 = vmatprep.subr.bf16.mxu0 0
        %452 = vmatpush1.bf16.msra.mxu0 0
        %453 = vmatprep.subr.bf16.mxu0 %v439
        %454 = vmatpush1.bf16.msra.mxu0 %v436
        %455 = vmatprep.subr.bf16.mxu0 %v425
        %456 = vmatpush1.bf16.msra.mxu0 %v424
        %457 = vmatprep.subr.bf16.mxu0 0
        %458 = vmatpush2.bf16.msra.mxu0 0
        %459 = vmatprep.subr.bf16.mxu0 0
        %460 = vmatpush2.bf16.msra.mxu0 0
        %461 = vmatprep.subr.bf16.mxu0 0
        %462 = vmatpush2.bf16.msra.mxu0 0
        %463 = vmatprep.subr.bf16.mxu0 0
        %464 = vmatpush2.bf16.msra.mxu0 0
        %465 = vmatprep.subr.bf16.mxu0 0
        %466 = vmatpush2.bf16.msra.mxu0 0
        %467 = vmatprep.subr.bf16.mxu0 0
        %468 = vmatpush2.bf16.msra.mxu0 0
        %469 = vmatprep.subr.bf16.mxu0 0
        %470 = vmatpush2.bf16.msra.mxu0 0
        %471 = vmatprep.subr.bf16.mxu0 0
        %472 = vmatpush2.bf16.msra.mxu0 0
        %473 = vmatprep.mubr.bf16.mxu0 0
        %474 = vmatmul.mubr.bf16.gmra.mxu0 %v432
        %v475 = vpop.f32.mrf.mxu0
        %v476 = vadd.f32 0.0, %v475
        %v477 = vpop.f32.mrf.mxu0
        %v478 = vadd.f32 0.0, %v477
        %v479 = vpop.f32.mrf.mxu0
        %v480 = vpop.f32.mrf.mxu0
        %481 = vdwg.mxu0
        %v483 = vlaneseq
        %v484 = vshrl.u32 %v483, 7
        %v485 = vsub.s32 0, %v484
        %v486 = vrot.slane %v399, %v485
        %v487 = vlaneseq
        %v488 = vshrl.u32 %v487, 7
        %v489 = vsub.s32 1, %v488
        %v490 = vrot.slane %v399, %v489
        %v493 = vmul.f32 %v476, %v486
        %v494 = vmul.f32 %v478, %v490
        %v498 = vunpack.c.l.b16 %v408
        %v499 = vunpack.c.h.b16 %v408
        %v500 = vunpack.c.l.b16 %v409
        %v501 = vunpack.c.h.b16 %v409
        %v502 = vunpack.c.l.b16 %v410
        %v503 = vunpack.c.h.b16 %v410
        %v504 = vpack.c.b16 %v500, %v498
        %v505 = vpack.c.b16 %v501, %v499
        %v506 = vpack.c.b16 %v502, %v502
        %v507 = vpack.c.b16 %v503, %v503
        %v511 = vsel %vm430, %v397, 0
        %v514 = vsel %vm434, %v506, 0
        %v517 = vsel %vm434, %v507, 0
        %519 = vmatprep.subr.bf16.mxu0 0
        %520 = vmatpush1.bf16.msra.mxu0 0
        %521 = vmatprep.subr.bf16.mxu0 0
        %522 = vmatpush1.bf16.msra.mxu0 0
        %523 = vmatprep.subr.bf16.mxu0 0
        %524 = vmatpush1.bf16.msra.mxu0 0
        %525 = vmatprep.subr.bf16.mxu0 0
        %526 = vmatpush1.bf16.msra.mxu0 0
        %527 = vmatprep.subr.bf16.mxu0 0
        %528 = vmatpush1.bf16.msra.mxu0 0
        %529 = vmatprep.subr.bf16.mxu0 0
        %530 = vmatpush1.bf16.msra.mxu0 0
        %531 = vmatprep.subr.bf16.mxu0 %v517
        %532 = vmatpush1.bf16.msra.mxu0 %v514
        %533 = vmatprep.subr.bf16.mxu0 %v505
        %534 = vmatpush1.bf16.msra.mxu0 %v504
        %535 = vmatprep.subr.bf16.mxu0 0
        %536 = vmatpush2.bf16.msra.mxu0 0
        %537 = vmatprep.subr.bf16.mxu0 0
        %538 = vmatpush2.bf16.msra.mxu0 0
        %539 = vmatprep.subr.bf16.mxu0 0
        %540 = vmatpush2.bf16.msra.mxu0 0
        %541 = vmatprep.subr.bf16.mxu0 0
        %542 = vmatpush2.bf16.msra.mxu0 0
        %543 = vmatprep.subr.bf16.mxu0 0
        %544 = vmatpush2.bf16.msra.mxu0 0
        %545 = vmatprep.subr.bf16.mxu0 0
        %546 = vmatpush2.bf16.msra.mxu0 0
        %547 = vmatprep.subr.bf16.mxu0 0
        %548 = vmatpush2.bf16.msra.mxu0 0
        %549 = vmatprep.subr.bf16.mxu0 0
        %550 = vmatpush2.bf16.msra.mxu0 0
        %551 = vmatprep.mubr.bf16.mxu0 0
        %552 = vmatmul.mubr.bf16.gmra.mxu0 %v511
        %v553 = vpop.f32.mrf.mxu0
        %v554 = vadd.f32 %v493, %v553
        %v555 = vpop.f32.mrf.mxu0
        %v556 = vadd.f32 %v494, %v555
        %v557 = vpop.f32.mrf.mxu0
        %v558 = vpop.f32.mrf.mxu0
        %559 = vdwg.mxu0
        %s560 = scalar_lea.vmem %s389, 4
        %v561 = vld [vmem:[%s560] ss:$8 sm:$0x3]
        %v563 = vlaneseq
        %v564 = vshrl.u32 %v563, 7
        %v565 = vsub.s32 0, %v564
        %v566 = vrot.slane %v561, %v565
        %v567 = vlaneseq
        %v568 = vshrl.u32 %v567, 7
        %v569 = vsub.s32 1, %v568
        %v570 = vrot.slane %v561, %v569
        %v573 = vadd.f32 %v554, %v566
        %v574 = vadd.f32 %v556, %v570
        %s575 = scalar_lea.vmem %s389, 5
        %v576 = vld [vmem:[%s575] ss:$8 sm:$0x3]
        %v577 = vmul.f32 %v576, %v399
        %v579 = vlaneseq
        %v580 = vshrl.u32 %v579, 7
        %v581 = vsub.s32 0, %v580
        %v582 = vrot.slane %v577, %v581
        %v583 = vlaneseq
        %v584 = vshrl.u32 %v583, 7
        %v585 = vsub.s32 1, %v584
        %v586 = vrot.slane %v577, %v585
        %v589 = vadd.f32 %v573, %v582
        %v590 = vadd.f32 %v574, %v586
        %v591 = vmax.f32 %v589, 0.0
        %v592 = vmax.f32 %v590, 0.0
        %s593 = scalar_lea.vmem %s389, 1
        %v594 = vld [vmem:[%s593] ss:$8 sm:$0x3]
        %s595 = scalar_lea.vmem %s389, 2
        %v596 = vld [vmem:[%s595] ss:$8 sm:$0x3]
        %v598 = vlaneseq
        %v599 = vshrl.u32 %v598, 7
        %v600 = vsub.s32 0, %v599
        %v601 = vrot.slane %v594, %v600
        %v602 = vlaneseq
        %v603 = vshrl.u32 %v602, 7
        %v604 = vsub.s32 1, %v603
        %v605 = vrot.slane %v594, %v604
        %v608 = vmul.f32 %v591, %v601
        %v609 = vmul.f32 %v592, %v605
        %v610 = vpack.c.bf16 %v608, %v608
        %v611 = vpack.c.bf16 %v609, %v609
        %v612 = vpack.c.bf16 %v591, %v591
        %v613 = vpack.c.bf16 %v592, %v592
        %v614 = vld [vmem:[%s310] sm:$0xff]
        %v615 = vld [vmem:[%s310 + $0x8] sm:$0xff]
        %v616 = vld [vmem:[%s310 + $0x10] sm:$0xff]
        %v617 = vld [vmem:[%s310 + $0x18] sm:$0xff]
        %v618 = vld [vmem:[%s310 + $0x20] sm:$0xff]
        %v619 = vld [vmem:[%s310 + $0x28] sm:$0xff]
        %v620 = vld [vmem:[%s310 + $0x30] sm:$0xff]
        %v621 = vld [vmem:[%s310 + $0x38] sm:$0xff]
        %v622 = vld [vmem:[%s310 + $0x40] sm:$0xff]
        %v623 = vld [vmem:[%s310 + $0x48] sm:$0xff]
        %v624 = vld [vmem:[%s310 + $0x50] sm:$0xff]
        %v625 = vld [vmem:[%s310 + $0x58] sm:$0xff]
        %v626 = vld [vmem:[%s310 + $0x60] sm:$0xff]
        %v627 = vld [vmem:[%s310 + $0x68] sm:$0xff]
        %v628 = vld [vmem:[%s310 + $0x70] sm:$0xff]
        %v629 = vld [vmem:[%s310 + $0x78] sm:$0xff]
        %v630 = vld [vmem:[%s310 + $0x80] sm:$0xff]
        %v631 = vld [vmem:[%s310 + $0x88] sm:$0xff]
        %v632 = vld [vmem:[%s310 + $0x90] sm:$0xff]
        %v633 = vld [vmem:[%s310 + $0x98] sm:$0xff]
        %v634 = vld [vmem:[%s310 + $0xa0] sm:$0xff]
        %v635 = vld [vmem:[%s310 + $0xa8] sm:$0xff]
        %v636 = vld [vmem:[%s310 + $0xb0] sm:$0xff]
        %v637 = vld [vmem:[%s310 + $0xb8] sm:$0xff]
        %v638 = vld [vmem:[%s310 + $0xc0] sm:$0xff]
        %v639 = vld [vmem:[%s310 + $0xc8] sm:$0xff]
        %v640 = vld [vmem:[%s310 + $0xd0] sm:$0xff]
        %v641 = vld [vmem:[%s310 + $0xd8] sm:$0xff]
        %v642 = vld [vmem:[%s310 + $0xe0] sm:$0xff]
        %v643 = vld [vmem:[%s310 + $0xe8] sm:$0xff]
        %v644 = vld [vmem:[%s310 + $0xf0] sm:$0xff]
        %v645 = vld [vmem:[%s310 + $0xf8] sm:$0xff]
        %s646 = scalar_lea.vmem %s310, 256 [#allocation4]
        %v647 = vld [vmem:[%s646] sm:$0xff]
        %v648 = vld [vmem:[%s646 + $0x8] sm:$0xff]
        %v649 = vld [vmem:[%s646 + $0x10] sm:$0xff]
        %v650 = vld [vmem:[%s646 + $0x18] sm:$0xff]
        %v651 = vld [vmem:[%s646 + $0x20] sm:$0xff]
        %v652 = vld [vmem:[%s646 + $0x28] sm:$0xff]
        %v653 = vld [vmem:[%s646 + $0x30] sm:$0xff]
        %v654 = vld [vmem:[%s646 + $0x38] sm:$0xff]
        %v655 = vld [vmem:[%s646 + $0x40] sm:$0xff]
        %v656 = vld [vmem:[%s646 + $0x48] sm:$0xff]
        %v657 = vld [vmem:[%s646 + $0x50] sm:$0xff]
        %v658 = vld [vmem:[%s646 + $0x58] sm:$0xff]
        %v659 = vld [vmem:[%s646 + $0x60] sm:$0xff]
        %v660 = vld [vmem:[%s646 + $0x68] sm:$0xff]
        %v661 = vld [vmem:[%s646 + $0x70] sm:$0xff]
        %v662 = vld [vmem:[%s646 + $0x78] sm:$0xff]
        %v663 = vld [vmem:[%s646 + $0x80] sm:$0xff]
        %v664 = vld [vmem:[%s646 + $0x88] sm:$0xff]
        %v665 = vld [vmem:[%s646 + $0x90] sm:$0xff]
        %v666 = vld [vmem:[%s646 + $0x98] sm:$0xff]
        %v667 = vld [vmem:[%s646 + $0xa0] sm:$0xff]
        %v668 = vld [vmem:[%s646 + $0xa8] sm:$0xff]
        %v669 = vld [vmem:[%s646 + $0xb0] sm:$0xff]
        %v670 = vld [vmem:[%s646 + $0xb8] sm:$0xff]
        %v671 = vld [vmem:[%s646 + $0xc0] sm:$0xff]
        %v672 = vld [vmem:[%s646 + $0xc8] sm:$0xff]
        %v673 = vld [vmem:[%s646 + $0xd0] sm:$0xff]
        %v674 = vld [vmem:[%s646 + $0xd8] sm:$0xff]
        %v675 = vld [vmem:[%s646 + $0xe0] sm:$0xff]
        %v676 = vld [vmem:[%s646 + $0xe8] sm:$0xff]
        %v677 = vld [vmem:[%s646 + $0xf0] sm:$0xff]
        %v678 = vld [vmem:[%s646 + $0xf8] sm:$0xff]
        %v711 = vunpack.c.l.b16 %v647
        %v712 = vunpack.c.h.b16 %v647
        %v713 = vunpack.c.l.b16 %v648
        %v714 = vunpack.c.h.b16 %v648
        %v715 = vunpack.c.l.b16 %v649
        %v716 = vunpack.c.h.b16 %v649
        %v717 = vunpack.c.l.b16 %v650
        %v718 = vunpack.c.h.b16 %v650
        %v719 = vunpack.c.l.b16 %v651
        %v720 = vunpack.c.h.b16 %v651
        %v721 = vunpack.c.l.b16 %v652
        %v722 = vunpack.c.h.b16 %v652
        %v723 = vunpack.c.l.b16 %v653
        %v724 = vunpack.c.h.b16 %v653
        %v725 = vunpack.c.l.b16 %v654
        %v726 = vunpack.c.h.b16 %v654
        %v727 = vunpack.c.l.b16 %v655
        %v728 = vunpack.c.h.b16 %v655
        %v729 = vunpack.c.l.b16 %v656
        %v730 = vunpack.c.h.b16 %v656
        %v731 = vunpack.c.l.b16 %v657
        %v732 = vunpack.c.h.b16 %v657
        %v733 = vunpack.c.l.b16 %v658
        %v734 = vunpack.c.h.b16 %v658
        %v735 = vunpack.c.l.b16 %v659
        %v736 = vunpack.c.h.b16 %v659
        %v737 = vunpack.c.l.b16 %v660
        %v738 = vunpack.c.h.b16 %v660
        %v739 = vunpack.c.l.b16 %v661
        %v740 = vunpack.c.h.b16 %v661
        %v741 = vunpack.c.l.b16 %v662
        %v742 = vunpack.c.h.b16 %v662
        %v743 = vunpack.c.l.b16 %v663
        %v744 = vunpack.c.h.b16 %v663
        %v745 = vunpack.c.l.b16 %v664
        %v746 = vunpack.c.h.b16 %v664
        %v747 = vunpack.c.l.b16 %v665
        %v748 = vunpack.c.h.b16 %v665
        %v749 = vunpack.c.l.b16 %v666
        %v750 = vunpack.c.h.b16 %v666
        %v751 = vunpack.c.l.b16 %v667
        %v752 = vunpack.c.h.b16 %v667
        %v753 = vunpack.c.l.b16 %v668
        %v754 = vunpack.c.h.b16 %v668
        %v755 = vunpack.c.l.b16 %v669
        %v756 = vunpack.c.h.b16 %v669
        %v757 = vunpack.c.l.b16 %v670
        %v758 = vunpack.c.h.b16 %v670
        %v759 = vunpack.c.l.b16 %v671
        %v760 = vunpack.c.h.b16 %v671
        %v761 = vunpack.c.l.b16 %v672
        %v762 = vunpack.c.h.b16 %v672
        %v763 = vunpack.c.l.b16 %v673
        %v764 = vunpack.c.h.b16 %v673
        %v765 = vunpack.c.l.b16 %v674
        %v766 = vunpack.c.h.b16 %v674
        %v767 = vunpack.c.l.b16 %v675
        %v768 = vunpack.c.h.b16 %v675
        %v769 = vunpack.c.l.b16 %v676
        %v770 = vunpack.c.h.b16 %v676
        %v771 = vunpack.c.l.b16 %v677
        %v772 = vunpack.c.h.b16 %v677
        %v773 = vunpack.c.l.b16 %v678
        %v774 = vunpack.c.h.b16 %v678
        %v775 = vpack.c.b16 %v713, %v711
        %v776 = vpack.c.b16 %v714, %v712
        %v777 = vpack.c.b16 %v717, %v715
        %v778 = vpack.c.b16 %v718, %v716
        %v779 = vpack.c.b16 %v721, %v719
        %v780 = vpack.c.b16 %v722, %v720
        %v781 = vpack.c.b16 %v725, %v723
        %v782 = vpack.c.b16 %v726, %v724
        %v783 = vpack.c.b16 %v729, %v727
        %v784 = vpack.c.b16 %v730, %v728
        %v785 = vpack.c.b16 %v733, %v731
        %v786 = vpack.c.b16 %v734, %v732
        %v787 = vpack.c.b16 %v737, %v735
        %v788 = vpack.c.b16 %v738, %v736
        %v789 = vpack.c.b16 %v741, %v739
        %v790 = vpack.c.b16 %v742, %v740
        %v791 = vpack.c.b16 %v745, %v743
        %v792 = vpack.c.b16 %v746, %v744
        %v793 = vpack.c.b16 %v749, %v747
        %v794 = vpack.c.b16 %v750, %v748
        %v795 = vpack.c.b16 %v753, %v751
        %v796 = vpack.c.b16 %v754, %v752
        %v797 = vpack.c.b16 %v757, %v755
        %v798 = vpack.c.b16 %v758, %v756
        %v799 = vpack.c.b16 %v761, %v759
        %v800 = vpack.c.b16 %v762, %v760
        %v801 = vpack.c.b16 %v765, %v763
        %v802 = vpack.c.b16 %v766, %v764
        %v803 = vpack.c.b16 %v769, %v767
        %v804 = vpack.c.b16 %v770, %v768
        %v805 = vpack.c.b16 %v773, %v771
        %v806 = vpack.c.b16 %v774, %v772
        %839 = vmatprep.subr.bf16.mxu0 %v790
        %840 = vmatpush1.bf16.msra.mxu0 %v789
        %841 = vmatprep.subr.bf16.mxu0 %v788
        %842 = vmatpush1.bf16.msra.mxu0 %v787
        %843 = vmatprep.subr.bf16.mxu0 %v786
        %844 = vmatpush1.bf16.msra.mxu0 %v785
        %845 = vmatprep.subr.bf16.mxu0 %v784
        %846 = vmatpush1.bf16.msra.mxu0 %v783
        %847 = vmatprep.subr.bf16.mxu0 %v782
        %848 = vmatpush1.bf16.msra.mxu0 %v781
        %849 = vmatprep.subr.bf16.mxu0 %v780
        %850 = vmatpush1.bf16.msra.mxu0 %v779
        %851 = vmatprep.subr.bf16.mxu0 %v778
        %852 = vmatpush1.bf16.msra.mxu0 %v777
        %853 = vmatprep.subr.bf16.mxu0 %v776
        %854 = vmatpush1.bf16.msra.mxu0 %v775
        %855 = vmatprep.subr.bf16.mxu0 %v806
        %856 = vmatpush2.bf16.msra.mxu0 %v805
        %857 = vmatprep.subr.bf16.mxu0 %v804
        %858 = vmatpush2.bf16.msra.mxu0 %v803
        %859 = vmatprep.subr.bf16.mxu0 %v802
        %860 = vmatpush2.bf16.msra.mxu0 %v801
        %861 = vmatprep.subr.bf16.mxu0 %v800
        %862 = vmatpush2.bf16.msra.mxu0 %v799
        %863 = vmatprep.subr.bf16.mxu0 %v798
        %864 = vmatpush2.bf16.msra.mxu0 %v797
        %865 = vmatprep.subr.bf16.mxu0 %v796
        %866 = vmatpush2.bf16.msra.mxu0 %v795
        %867 = vmatprep.subr.bf16.mxu0 %v794
        %868 = vmatpush2.bf16.msra.mxu0 %v793
        %869 = vmatprep.subr.bf16.mxu0 %v792
        %870 = vmatpush2.bf16.msra.mxu0 %v791
        %871 = vmatprep.mubr.bf16.mxu0 %v611
        %872 = vmatmul.mubr.bf16.gmra.mxu0 %v610
        %v873 = vpop.f32.mrf.mxu0
        %v874 = vadd.f32 0.0, %v873
        %v875 = vpop.f32.mrf.mxu0
        %v876 = vadd.f32 0.0, %v875
        %v877 = vpop.f32.mrf.mxu0
        %v878 = vpop.f32.mrf.mxu0
        %879 = vdwg.mxu0
        %v881 = vlaneseq
        %v882 = vshrl.u32 %v881, 7
        %v883 = vsub.s32 0, %v882
        %v884 = vrot.slane %v596, %v883
        %v885 = vlaneseq
        %v886 = vshrl.u32 %v885, 7
        %v887 = vsub.s32 1, %v886
        %v888 = vrot.slane %v596, %v887
        %v891 = vmul.f32 %v874, %v884
        %v892 = vmul.f32 %v876, %v888
        %v925 = vunpack.c.l.b16 %v614
        %v926 = vunpack.c.h.b16 %v614
        %v927 = vunpack.c.l.b16 %v615
        %v928 = vunpack.c.h.b16 %v615
        %v929 = vunpack.c.l.b16 %v616
        %v930 = vunpack.c.h.b16 %v616
        %v931 = vunpack.c.l.b16 %v617
        %v932 = vunpack.c.h.b16 %v617
        %v933 = vunpack.c.l.b16 %v618
        %v934 = vunpack.c.h.b16 %v618
        %v935 = vunpack.c.l.b16 %v619
        %v936 = vunpack.c.h.b16 %v619
        %v937 = vunpack.c.l.b16 %v620
        %v938 = vunpack.c.h.b16 %v620
        %v939 = vunpack.c.l.b16 %v621
        %v940 = vunpack.c.h.b16 %v621
        %v941 = vunpack.c.l.b16 %v622
        %v942 = vunpack.c.h.b16 %v622
        %v943 = vunpack.c.l.b16 %v623
        %v944 = vunpack.c.h.b16 %v623
        %v945 = vunpack.c.l.b16 %v624
        %v946 = vunpack.c.h.b16 %v624
        %v947 = vunpack.c.l.b16 %v625
        %v948 = vunpack.c.h.b16 %v625
        %v949 = vunpack.c.l.b16 %v626
        %v950 = vunpack.c.h.b16 %v626
        %v951 = vunpack.c.l.b16 %v627
        %v952 = vunpack.c.h.b16 %v627
        %v953 = vunpack.c.l.b16 %v628
        %v954 = vunpack.c.h.b16 %v628
        %v955 = vunpack.c.l.b16 %v629
        %v956 = vunpack.c.h.b16 %v629
        %v957 = vunpack.c.l.b16 %v630
        %v958 = vunpack.c.h.b16 %v630
        %v959 = vunpack.c.l.b16 %v631
        %v960 = vunpack.c.h.b16 %v631
        %v961 = vunpack.c.l.b16 %v632
        %v962 = vunpack.c.h.b16 %v632
        %v963 = vunpack.c.l.b16 %v633
        %v964 = vunpack.c.h.b16 %v633
        %v965 = vunpack.c.l.b16 %v634
        %v966 = vunpack.c.h.b16 %v634
        %v967 = vunpack.c.l.b16 %v635
        %v968 = vunpack.c.h.b16 %v635
        %v969 = vunpack.c.l.b16 %v636
        %v970 = vunpack.c.h.b16 %v636
        %v971 = vunpack.c.l.b16 %v637
        %v972 = vunpack.c.h.b16 %v637
        %v973 = vunpack.c.l.b16 %v638
        %v974 = vunpack.c.h.b16 %v638
        %v975 = vunpack.c.l.b16 %v639
        %v976 = vunpack.c.h.b16 %v639
        %v977 = vunpack.c.l.b16 %v640
        %v978 = vunpack.c.h.b16 %v640
        %v979 = vunpack.c.l.b16 %v641
        %v980 = vunpack.c.h.b16 %v641
        %v981 = vunpack.c.l.b16 %v642
        %v982 = vunpack.c.h.b16 %v642
        %v983 = vunpack.c.l.b16 %v643
        %v984 = vunpack.c.h.b16 %v643
        %v985 = vunpack.c.l.b16 %v644
        %v986 = vunpack.c.h.b16 %v644
        %v987 = vunpack.c.l.b16 %v645
        %v988 = vunpack.c.h.b16 %v645
        %v989 = vpack.c.b16 %v927, %v925
        %v990 = vpack.c.b16 %v928, %v926
        %v991 = vpack.c.b16 %v931, %v929
        %v992 = vpack.c.b16 %v932, %v930
        %v993 = vpack.c.b16 %v935, %v933
        %v994 = vpack.c.b16 %v936, %v934
        %v995 = vpack.c.b16 %v939, %v937
        %v996 = vpack.c.b16 %v940, %v938
        %v997 = vpack.c.b16 %v943, %v941
        %v998 = vpack.c.b16 %v944, %v942
        %v999 = vpack.c.b16 %v947, %v945
        %v1000 = vpack.c.b16 %v948, %v946
        %v1001 = vpack.c.b16 %v951, %v949
        %v1002 = vpack.c.b16 %v952, %v950
        %v1003 = vpack.c.b16 %v955, %v953
        %v1004 = vpack.c.b16 %v956, %v954
        %v1005 = vpack.c.b16 %v959, %v957
        %v1006 = vpack.c.b16 %v960, %v958
        %v1007 = vpack.c.b16 %v963, %v961
        %v1008 = vpack.c.b16 %v964, %v962
        %v1009 = vpack.c.b16 %v967, %v965
        %v1010 = vpack.c.b16 %v968, %v966
        %v1011 = vpack.c.b16 %v971, %v969
        %v1012 = vpack.c.b16 %v972, %v970
        %v1013 = vpack.c.b16 %v975, %v973
        %v1014 = vpack.c.b16 %v976, %v974
        %v1015 = vpack.c.b16 %v979, %v977
        %v1016 = vpack.c.b16 %v980, %v978
        %v1017 = vpack.c.b16 %v983, %v981
        %v1018 = vpack.c.b16 %v984, %v982
        %v1019 = vpack.c.b16 %v987, %v985
        %v1020 = vpack.c.b16 %v988, %v986
        %1053 = vmatprep.subr.bf16.mxu0 %v1004
        %1054 = vmatpush1.bf16.msra.mxu0 %v1003
        %1055 = vmatprep.subr.bf16.mxu0 %v1002
        %1056 = vmatpush1.bf16.msra.mxu0 %v1001
        %1057 = vmatprep.subr.bf16.mxu0 %v1000
        %1058 = vmatpush1.bf16.msra.mxu0 %v999
        %1059 = vmatprep.subr.bf16.mxu0 %v998
        %1060 = vmatpush1.bf16.msra.mxu0 %v997
        %1061 = vmatprep.subr.bf16.mxu0 %v996
        %1062 = vmatpush1.bf16.msra.mxu0 %v995
        %1063 = vmatprep.subr.bf16.mxu0 %v994
        %1064 = vmatpush1.bf16.msra.mxu0 %v993
        %1065 = vmatprep.subr.bf16.mxu0 %v992
        %1066 = vmatpush1.bf16.msra.mxu0 %v991
        %1067 = vmatprep.subr.bf16.mxu0 %v990
        %1068 = vmatpush1.bf16.msra.mxu0 %v989
        %1069 = vmatprep.subr.bf16.mxu0 %v1020
        %1070 = vmatpush2.bf16.msra.mxu0 %v1019
        %1071 = vmatprep.subr.bf16.mxu0 %v1018
        %1072 = vmatpush2.bf16.msra.mxu0 %v1017
        %1073 = vmatprep.subr.bf16.mxu0 %v1016
        %1074 = vmatpush2.bf16.msra.mxu0 %v1015
        %1075 = vmatprep.subr.bf16.mxu0 %v1014
        %1076 = vmatpush2.bf16.msra.mxu0 %v1013
        %1077 = vmatprep.subr.bf16.mxu0 %v1012
        %1078 = vmatpush2.bf16.msra.mxu0 %v1011
        %1079 = vmatprep.subr.bf16.mxu0 %v1010
        %1080 = vmatpush2.bf16.msra.mxu0 %v1009
        %1081 = vmatprep.subr.bf16.mxu0 %v1008
        %1082 = vmatpush2.bf16.msra.mxu0 %v1007
        %1083 = vmatprep.subr.bf16.mxu0 %v1006
        %1084 = vmatpush2.bf16.msra.mxu0 %v1005
        %1085 = vmatprep.mubr.bf16.mxu0 %v613
        %1086 = vmatmul.mubr.bf16.gmra.mxu0 %v612
        %v1087 = vpop.f32.mrf.mxu0
        %v1088 = vadd.f32 %v891, %v1087
        %v1089 = vpop.f32.mrf.mxu0
        %v1090 = vadd.f32 %v892, %v1089
        %v1091 = vpop.f32.mrf.mxu0
        %v1092 = vpop.f32.mrf.mxu0
        %1093 = vdwg.mxu0
        %s1094 = scalar_lea.vmem %s389, 6
        %v1095 = vld [vmem:[%s1094] ss:$8 sm:$0x3]
        %v1097 = vlaneseq
        %v1098 = vshrl.u32 %v1097, 7
        %v1099 = vsub.s32 0, %v1098
        %v1100 = vrot.slane %v1095, %v1099
        %v1101 = vlaneseq
        %v1102 = vshrl.u32 %v1101, 7
        %v1103 = vsub.s32 1, %v1102
        %v1104 = vrot.slane %v1095, %v1103
        %v1107 = vadd.f32 %v1088, %v1100
        %v1108 = vadd.f32 %v1090, %v1104
        %s1109 = scalar_lea.vmem %s389, 7
        %v1110 = vld [vmem:[%s1109] ss:$8 sm:$0x3]
        %v1111 = vmul.f32 %v1110, %v596
        %v1113 = vlaneseq
        %v1114 = vshrl.u32 %v1113, 7
        %v1115 = vsub.s32 0, %v1114
        %v1116 = vrot.slane %v1111, %v1115
        %v1117 = vlaneseq
        %v1118 = vshrl.u32 %v1117, 7
        %v1119 = vsub.s32 1, %v1118
        %v1120 = vrot.slane %v1111, %v1119
        %v1123 = vadd.f32 %v1107, %v1116
        %v1124 = vadd.f32 %v1108, %v1120
        %v1125 = vmax.f32 %v1123, 0.0
        %v1126 = vmax.f32 %v1124, 0.0
        %s1127 = scalar_lea.vmem %s389, 3
        %v1128 = vld [vmem:[%s1127] ss:$8 sm:$0x3]
        %s1129 = scalar_lea.vmem %s389, 16
        %v1130 = vld [vmem:[%s1129] ss:$8 sm:$0x3]
        %1132 = vrot.lane.b32.xlu0 %v1130, 2
        %v1133 = vpop.permute.xlu0 %1132
        %v1135 = vmul.f32 %v1130, %v1133
        %1137 = vrot.lane.b32.xlu0 %v1135, 127
        %v1138 = vpop.permute.xlu0 %1137
        %v1140 = vadd.f32 %v1130, %v1138
        %v1141 = vld [vmem:[%s381] sm:$0x3]
        %v1142 = vunpack.c.l.bf16 %v1141
        %s1143 = scalar_lea.vmem %s381, 2
        %v1144 = vld [vmem:[%s1143] sm:$0x3]
        %v1145 = vunpack.c.l.bf16 %v1144
        %1146 = vset.pattern.permute.xlu0 0
        %1147 = vperm.xlu0 %1146, %v1130
        %v1148 = vpop.permute.xlu0 %1147
        %v1150 = vlaneseq
        %v1151 = vshrl.u32 %v1150, 7
        %v1152 = vsub.s32 0, %v1151
        %v1153 = vrot.slane %v1148, %v1152
        %v1154 = vmul.f32 %v1128, %v1153
        %v1157 = vunpack.c.l.s4 857870592
        %v1158 = vunpack.c.0.s8 %v1157
        %v1159 = vlaneseq
        %v1160 = vshrl.u32 %v1159, 7
        %v1161 = vsub.s32 %v1158, %v1160
        %v1162 = vrot.slane %v1154, %v1161
        %v1164 = vmul.f32 %v1145, %v1162
        %v1165 = vadd.f32 %v1142, %v1164
        %v1167 = vlaneseq
        %v1168 = vshrl.u32 %v1167, 7
        %v1169 = vsub.s32 0, %v1168
        %v1170 = vrot.slane %v1165, %v1169
        %v1171 = vlaneseq
        %v1172 = vshrl.u32 %v1171, 7
        %v1173 = vsub.s32 2, %v1172
        %v1174 = vrot.slane %v1165, %v1173
        %v1177 = vlaneseq
        %v1178 = vshrl.u32 %v1177, 7
        %v1179 = vsub.s32 0, %v1178
        %v1180 = vrot.slane %v1170, %v1179
        %v1181 = vlaneseq
        %v1182 = vshrl.u32 %v1181, 7
        %v1183 = vsub.s32 0, %v1182
        %v1184 = vrot.slane %v1174, %v1183
        %v1185 = vmul.f32 %v1125, %v1180
        %v1186 = vmul.f32 %v1126, %v1184
        %v1187 = vadd.f32 %v1185, %v1186
        %1188 = vadd.xlane.f32.xlu0 %v1187
        %v1189 = vpop.xlane.xlu0 %1188
        %v1191 = vlaneseq
        %v1192 = vshrl.u32 %v1191, 7
        %v1193 = vsub.s32 0, %v1192
        %v1194 = vrot.slane %v1140, %v1193
        %v1196 = vadd.f32 %v1189, %v1194
        %s1197 = scalar_lea.vmem %s319, 1 [#allocation6]
        %v1198 = vld [vmem:[%s1197] sm:$0x1]
        %s1199 = scalar_lea.vmem %s389, 32
        %v1200 = vld [vmem:[%s1199] ss:$8 sm:$0x3]
        %v1202 = vlaneseq
        %v1203 = vshrl.u32 %v1202, 7
        %v1204 = vsub.s32 0, %v1203
        %v1205 = vrot.slane %v1198, %v1204
        %v1207 = vmul.f32 %v396, %v1205
        %v1208 = vpack.c.bf16 %v1207, %v1207
        %s1209 = scalar_lea.vmem %s374, 48
        %v1210 = vld [vmem:[%s1209] sm:$0xff]
        %v1211 = vld [vmem:[%s1209 + $0x8] sm:$0xff]
        %v1212 = vld [vmem:[%s1209 + $0x10] sm:$0x33]
        %s1213 = scalar_lea.vmem %s374, 72
        %v1214 = vld [vmem:[%s1213] sm:$0xff]
        %v1215 = vld [vmem:[%s1213 + $0x8] sm:$0xff]
        %v1216 = vld [vmem:[%s1213 + $0x10] sm:$0x33]
        %v1220 = vunpack.c.l.b16 %v1214
        %v1221 = vunpack.c.h.b16 %v1214
        %v1222 = vunpack.c.l.b16 %v1215
        %v1223 = vunpack.c.h.b16 %v1215
        %v1224 = vunpack.c.l.b16 %v1216
        %v1225 = vunpack.c.h.b16 %v1216
        %v1226 = vpack.c.b16 %v1222, %v1220
        %v1227 = vpack.c.b16 %v1223, %v1221
        %v1228 = vpack.c.b16 %v1224, %v1224
        %v1229 = vpack.c.b16 %v1225, %v1225
        %v1233 = vsel %vm430, %v1208, 0
        %v1236 = vsel %vm434, %v1228, 0
        %v1239 = vsel %vm434, %v1229, 0
        %1241 = vmatprep.subr.bf16.mxu0 0
        %1242 = vmatpush1.bf16.msra.mxu0 0
        %1243 = vmatprep.subr.bf16.mxu0 0
        %1244 = vmatpush1.bf16.msra.mxu0 0
        %1245 = vmatprep.subr.bf16.mxu0 0
        %1246 = vmatpush1.bf16.msra.mxu0 0
        %1247 = vmatprep.subr.bf16.mxu0 0
        %1248 = vmatpush1.bf16.msra.mxu0 0
        %1249 = vmatprep.subr.bf16.mxu0 0
        %1250 = vmatpush1.bf16.msra.mxu0 0
        %1251 = vmatprep.subr.bf16.mxu0 0
        %1252 = vmatpush1.bf16.msra.mxu0 0
        %1253 = vmatprep.subr.bf16.mxu0 %v1239
        %1254 = vmatpush1.bf16.msra.mxu0 %v1236
        %1255 = vmatprep.subr.bf16.mxu0 %v1227
        %1256 = vmatpush1.bf16.msra.mxu0 %v1226
        %1257 = vmatprep.subr.bf16.mxu0 0
        %1258 = vmatpush2.bf16.msra.mxu0 0
        %1259 = vmatprep.subr.bf16.mxu0 0
        %1260 = vmatpush2.bf16.msra.mxu0 0
        %1261 = vmatprep.subr.bf16.mxu0 0
        %1262 = vmatpush2.bf16.msra.mxu0 0
        %1263 = vmatprep.subr.bf16.mxu0 0
        %1264 = vmatpush2.bf16.msra.mxu0 0
        %1265 = vmatprep.subr.bf16.mxu0 0
        %1266 = vmatpush2.bf16.msra.mxu0 0
        %1267 = vmatprep.subr.bf16.mxu0 0
        %1268 = vmatpush2.bf16.msra.mxu0 0
        %1269 = vmatprep.subr.bf16.mxu0 0
        %1270 = vmatpush2.bf16.msra.mxu0 0
        %1271 = vmatprep.subr.bf16.mxu0 0
        %1272 = vmatpush2.bf16.msra.mxu0 0
        %1273 = vmatprep.mubr.bf16.mxu0 0
        %1274 = vmatmul.mubr.bf16.gmra.mxu0 %v1233
        %v1275 = vpop.f32.mrf.mxu0
        %v1276 = vadd.f32 0.0, %v1275
        %v1277 = vpop.f32.mrf.mxu0
        %v1278 = vadd.f32 0.0, %v1277
        %v1279 = vpop.f32.mrf.mxu0
        %v1280 = vpop.f32.mrf.mxu0
        %1281 = vdwg.mxu0
        %v1283 = vlaneseq
        %v1284 = vshrl.u32 %v1283, 7
        %v1285 = vsub.s32 0, %v1284
        %v1286 = vrot.slane %v1200, %v1285
        %v1287 = vlaneseq
        %v1288 = vshrl.u32 %v1287, 7
        %v1289 = vsub.s32 1, %v1288
        %v1290 = vrot.slane %v1200, %v1289
        %v1293 = vmul.f32 %v1276, %v1286
        %v1294 = vmul.f32 %v1278, %v1290
        %v1298 = vunpack.c.l.b16 %v1210
        %v1299 = vunpack.c.h.b16 %v1210
        %v1300 = vunpack.c.l.b16 %v1211
        %v1301 = vunpack.c.h.b16 %v1211
        %v1302 = vunpack.c.l.b16 %v1212
        %v1303 = vunpack.c.h.b16 %v1212
        %v1304 = vpack.c.b16 %v1300, %v1298
        %v1305 = vpack.c.b16 %v1301, %v1299
        %v1306 = vpack.c.b16 %v1302, %v1302
        %v1307 = vpack.c.b16 %v1303, %v1303
        %v1311 = vsel %vm434, %v1306, 0
        %v1314 = vsel %vm434, %v1307, 0
        %1316 = vmatprep.subr.bf16.mxu0 0
        %1317 = vmatpush1.bf16.msra.mxu0 0
        %1318 = vmatprep.subr.bf16.mxu0 0
        %1319 = vmatpush1.bf16.msra.mxu0 0
        %1320 = vmatprep.subr.bf16.mxu0 0
        %1321 = vmatpush1.bf16.msra.mxu0 0
        %1322 = vmatprep.subr.bf16.mxu0 0
        %1323 = vmatpush1.bf16.msra.mxu0 0
        %1324 = vmatprep.subr.bf16.mxu0 0
        %1325 = vmatpush1.bf16.msra.mxu0 0
        %1326 = vmatprep.subr.bf16.mxu0 0
        %1327 = vmatpush1.bf16.msra.mxu0 0
        %1328 = vmatprep.subr.bf16.mxu0 %v1314
        %1329 = vmatpush1.bf16.msra.mxu0 %v1311
        %1330 = vmatprep.subr.bf16.mxu0 %v1305
        %1331 = vmatpush1.bf16.msra.mxu0 %v1304
        %1332 = vmatprep.subr.bf16.mxu0 0
        %1333 = vmatpush2.bf16.msra.mxu0 0
        %1334 = vmatprep.subr.bf16.mxu0 0
        %1335 = vmatpush2.bf16.msra.mxu0 0
        %1336 = vmatprep.subr.bf16.mxu0 0
        %1337 = vmatpush2.bf16.msra.mxu0 0
        %1338 = vmatprep.subr.bf16.mxu0 0
        %1339 = vmatpush2.bf16.msra.mxu0 0
        %1340 = vmatprep.subr.bf16.mxu0 0
        %1341 = vmatpush2.bf16.msra.mxu0 0
        %1342 = vmatprep.subr.bf16.mxu0 0
        %1343 = vmatpush2.bf16.msra.mxu0 0
        %1344 = vmatprep.subr.bf16.mxu0 0
        %1345 = vmatpush2.bf16.msra.mxu0 0
        %1346 = vmatprep.subr.bf16.mxu0 0
        %1347 = vmatpush2.bf16.msra.mxu0 0
        %1348 = vmatprep.mubr.bf16.mxu0 0
        %1349 = vmatmul.mubr.bf16.gmra.mxu0 %v511
        %v1350 = vpop.f32.mrf.mxu0
        %v1351 = vadd.f32 %v1293, %v1350
        %v1352 = vpop.f32.mrf.mxu0
        %v1353 = vadd.f32 %v1294, %v1352
        %v1354 = vpop.f32.mrf.mxu0
        %v1355 = vpop.f32.mrf.mxu0
        %1356 = vdwg.mxu0
        %s1357 = scalar_lea.vmem %s1199, 4
        %v1358 = vld [vmem:[%s1357] ss:$8 sm:$0x3]
        %v1360 = vlaneseq
        %v1361 = vshrl.u32 %v1360, 7
        %v1362 = vsub.s32 0, %v1361
        %v1363 = vrot.slane %v1358, %v1362
        %v1364 = vlaneseq
        %v1365 = vshrl.u32 %v1364, 7
        %v1366 = vsub.s32 1, %v1365
        %v1367 = vrot.slane %v1358, %v1366
        %v1370 = vadd.f32 %v1351, %v1363
        %v1371 = vadd.f32 %v1353, %v1367
        %s1372 = scalar_lea.vmem %s1199, 5
        %v1373 = vld [vmem:[%s1372] ss:$8 sm:$0x3]
        %v1374 = vmul.f32 %v1373, %v1200
        %v1376 = vlaneseq
        %v1377 = vshrl.u32 %v1376, 7
        %v1378 = vsub.s32 0, %v1377
        %v1379 = vrot.slane %v1374, %v1378
        %v1380 = vlaneseq
        %v1381 = vshrl.u32 %v1380, 7
        %v1382 = vsub.s32 1, %v1381
        %v1383 = vrot.slane %v1374, %v1382
        %v1386 = vadd.f32 %v1370, %v1379
        %v1387 = vadd.f32 %v1371, %v1383
        %v1388 = vmax.f32 %v1386, 0.0
        %v1389 = vmax.f32 %v1387, 0.0
        %s1390 = scalar_lea.vmem %s1199, 1
        %v1391 = vld [vmem:[%s1390] ss:$8 sm:$0x3]
        %s1392 = scalar_lea.vmem %s1199, 2
        %v1393 = vld [vmem:[%s1392] ss:$8 sm:$0x3]
        %v1395 = vlaneseq
        %v1396 = vshrl.u32 %v1395, 7
        %v1397 = vsub.s32 0, %v1396
        %v1398 = vrot.slane %v1391, %v1397
        %v1399 = vlaneseq
        %v1400 = vshrl.u32 %v1399, 7
        %v1401 = vsub.s32 1, %v1400
        %v1402 = vrot.slane %v1391, %v1401
        %v1405 = vmul.f32 %v1388, %v1398
        %v1406 = vmul.f32 %v1389, %v1402
        %v1407 = vpack.c.bf16 %v1405, %v1405
        %v1408 = vpack.c.bf16 %v1406, %v1406
        %v1409 = vpack.c.bf16 %v1388, %v1388
        %v1410 = vpack.c.bf16 %v1389, %v1389
        %s1411 = scalar_lea.vmem %s310, 512 [#allocation4]
        %v1412 = vld [vmem:[%s1411] sm:$0xff]
        %v1413 = vld [vmem:[%s1411 + $0x8] sm:$0xff]
        %v1414 = vld [vmem:[%s1411 + $0x10] sm:$0xff]
        %v1415 = vld [vmem:[%s1411 + $0x18] sm:$0xff]
        %v1416 = vld [vmem:[%s1411 + $0x20] sm:$0xff]
        %v1417 = vld [vmem:[%s1411 + $0x28] sm:$0xff]
        %v1418 = vld [vmem:[%s1411 + $0x30] sm:$0xff]
        %v1419 = vld [vmem:[%s1411 + $0x38] sm:$0xff]
        %v1420 = vld [vmem:[%s1411 + $0x40] sm:$0xff]
        %v1421 = vld [vmem:[%s1411 + $0x48] sm:$0xff]
        %v1422 = vld [vmem:[%s1411 + $0x50] sm:$0xff]
        %v1423 = vld [vmem:[%s1411 + $0x58] sm:$0xff]
        %v1424 = vld [vmem:[%s1411 + $0x60] sm:$0xff]
        %v1425 = vld [vmem:[%s1411 + $0x68] sm:$0xff]
        %v1426 = vld [vmem:[%s1411 + $0x70] sm:$0xff]
        %v1427 = vld [vmem:[%s1411 + $0x78] sm:$0xff]
        %v1428 = vld [vmem:[%s1411 + $0x80] sm:$0xff]
        %v1429 = vld [vmem:[%s1411 + $0x88] sm:$0xff]
        %v1430 = vld [vmem:[%s1411 + $0x90] sm:$0xff]
        %v1431 = vld [vmem:[%s1411 + $0x98] sm:$0xff]
        %v1432 = vld [vmem:[%s1411 + $0xa0] sm:$0xff]
        %v1433 = vld [vmem:[%s1411 + $0xa8] sm:$0xff]
        %v1434 = vld [vmem:[%s1411 + $0xb0] sm:$0xff]
        %v1435 = vld [vmem:[%s1411 + $0xb8] sm:$0xff]
        %v1436 = vld [vmem:[%s1411 + $0xc0] sm:$0xff]
        %v1437 = vld [vmem:[%s1411 + $0xc8] sm:$0xff]
        %v1438 = vld [vmem:[%s1411 + $0xd0] sm:$0xff]
        %v1439 = vld [vmem:[%s1411 + $0xd8] sm:$0xff]
        %v1440 = vld [vmem:[%s1411 + $0xe0] sm:$0xff]
        %v1441 = vld [vmem:[%s1411 + $0xe8] sm:$0xff]
        %v1442 = vld [vmem:[%s1411 + $0xf0] sm:$0xff]
        %v1443 = vld [vmem:[%s1411 + $0xf8] sm:$0xff]
        %s1444 = scalar_lea.vmem %s310, 768 [#allocation4]
        %v1445 = vld [vmem:[%s1444] sm:$0xff]
        %v1446 = vld [vmem:[%s1444 + $0x8] sm:$0xff]
        %v1447 = vld [vmem:[%s1444 + $0x10] sm:$0xff]
        %v1448 = vld [vmem:[%s1444 + $0x18] sm:$0xff]
        %v1449 = vld [vmem:[%s1444 + $0x20] sm:$0xff]
        %v1450 = vld [vmem:[%s1444 + $0x28] sm:$0xff]
        %v1451 = vld [vmem:[%s1444 + $0x30] sm:$0xff]
        %v1452 = vld [vmem:[%s1444 + $0x38] sm:$0xff]
        %v1453 = vld [vmem:[%s1444 + $0x40] sm:$0xff]
        %v1454 = vld [vmem:[%s1444 + $0x48] sm:$0xff]
        %v1455 = vld [vmem:[%s1444 + $0x50] sm:$0xff]
        %v1456 = vld [vmem:[%s1444 + $0x58] sm:$0xff]
        %v1457 = vld [vmem:[%s1444 + $0x60] sm:$0xff]
        %v1458 = vld [vmem:[%s1444 + $0x68] sm:$0xff]
        %v1459 = vld [vmem:[%s1444 + $0x70] sm:$0xff]
        %v1460 = vld [vmem:[%s1444 + $0x78] sm:$0xff]
        %v1461 = vld [vmem:[%s1444 + $0x80] sm:$0xff]
        %v1462 = vld [vmem:[%s1444 + $0x88] sm:$0xff]
        %v1463 = vld [vmem:[%s1444 + $0x90] sm:$0xff]
        %v1464 = vld [vmem:[%s1444 + $0x98] sm:$0xff]
        %v1465 = vld [vmem:[%s1444 + $0xa0] sm:$0xff]
        %v1466 = vld [vmem:[%s1444 + $0xa8] sm:$0xff]
        %v1467 = vld [vmem:[%s1444 + $0xb0] sm:$0xff]
        %v1468 = vld [vmem:[%s1444 + $0xb8] sm:$0xff]
        %v1469 = vld [vmem:[%s1444 + $0xc0] sm:$0xff]
        %v1470 = vld [vmem:[%s1444 + $0xc8] sm:$0xff]
        %v1471 = vld [vmem:[%s1444 + $0xd0] sm:$0xff]
        %v1472 = vld [vmem:[%s1444 + $0xd8] sm:$0xff]
        %v1473 = vld [vmem:[%s1444 + $0xe0] sm:$0xff]
        %v1474 = vld [vmem:[%s1444 + $0xe8] sm:$0xff]
        %v1475 = vld [vmem:[%s1444 + $0xf0] sm:$0xff]
        %v1476 = vld [vmem:[%s1444 + $0xf8] sm:$0xff]
        %v1509 = vunpack.c.l.b16 %v1445
        %v1510 = vunpack.c.h.b16 %v1445
        %v1511 = vunpack.c.l.b16 %v1446
        %v1512 = vunpack.c.h.b16 %v1446
        %v1513 = vunpack.c.l.b16 %v1447
        %v1514 = vunpack.c.h.b16 %v1447
        %v1515 = vunpack.c.l.b16 %v1448
        %v1516 = vunpack.c.h.b16 %v1448
        %v1517 = vunpack.c.l.b16 %v1449
        %v1518 = vunpack.c.h.b16 %v1449
        %v1519 = vunpack.c.l.b16 %v1450
        %v1520 = vunpack.c.h.b16 %v1450
        %v1521 = vunpack.c.l.b16 %v1451
        %v1522 = vunpack.c.h.b16 %v1451
        %v1523 = vunpack.c.l.b16 %v1452
        %v1524 = vunpack.c.h.b16 %v1452
        %v1525 = vunpack.c.l.b16 %v1453
        %v1526 = vunpack.c.h.b16 %v1453
        %v1527 = vunpack.c.l.b16 %v1454
        %v1528 = vunpack.c.h.b16 %v1454
        %v1529 = vunpack.c.l.b16 %v1455
        %v1530 = vunpack.c.h.b16 %v1455
        %v1531 = vunpack.c.l.b16 %v1456
        %v1532 = vunpack.c.h.b16 %v1456
        %v1533 = vunpack.c.l.b16 %v1457
        %v1534 = vunpack.c.h.b16 %v1457
        %v1535 = vunpack.c.l.b16 %v1458
        %v1536 = vunpack.c.h.b16 %v1458
        %v1537 = vunpack.c.l.b16 %v1459
        %v1538 = vunpack.c.h.b16 %v1459
        %v1539 = vunpack.c.l.b16 %v1460
        %v1540 = vunpack.c.h.b16 %v1460
        %v1541 = vunpack.c.l.b16 %v1461
        %v1542 = vunpack.c.h.b16 %v1461
        %v1543 = vunpack.c.l.b16 %v1462
        %v1544 = vunpack.c.h.b16 %v1462
        %v1545 = vunpack.c.l.b16 %v1463
        %v1546 = vunpack.c.h.b16 %v1463
        %v1547 = vunpack.c.l.b16 %v1464
        %v1548 = vunpack.c.h.b16 %v1464
        %v1549 = vunpack.c.l.b16 %v1465
        %v1550 = vunpack.c.h.b16 %v1465
        %v1551 = vunpack.c.l.b16 %v1466
        %v1552 = vunpack.c.h.b16 %v1466
        %v1553 = vunpack.c.l.b16 %v1467
        %v1554 = vunpack.c.h.b16 %v1467
        %v1555 = vunpack.c.l.b16 %v1468
        %v1556 = vunpack.c.h.b16 %v1468
        %v1557 = vunpack.c.l.b16 %v1469
        %v1558 = vunpack.c.h.b16 %v1469
        %v1559 = vunpack.c.l.b16 %v1470
        %v1560 = vunpack.c.h.b16 %v1470
        %v1561 = vunpack.c.l.b16 %v1471
        %v1562 = vunpack.c.h.b16 %v1471
        %v1563 = vunpack.c.l.b16 %v1472
        %v1564 = vunpack.c.h.b16 %v1472
        %v1565 = vunpack.c.l.b16 %v1473
        %v1566 = vunpack.c.h.b16 %v1473
        %v1567 = vunpack.c.l.b16 %v1474
        %v1568 = vunpack.c.h.b16 %v1474
        %v1569 = vunpack.c.l.b16 %v1475
        %v1570 = vunpack.c.h.b16 %v1475
        %v1571 = vunpack.c.l.b16 %v1476
        %v1572 = vunpack.c.h.b16 %v1476
        %v1573 = vpack.c.b16 %v1511, %v1509
        %v1574 = vpack.c.b16 %v1512, %v1510
        %v1575 = vpack.c.b16 %v1515, %v1513
        %v1576 = vpack.c.b16 %v1516, %v1514
        %v1577 = vpack.c.b16 %v1519, %v1517
        %v1578 = vpack.c.b16 %v1520, %v1518
        %v1579 = vpack.c.b16 %v1523, %v1521
        %v1580 = vpack.c.b16 %v1524, %v1522
        %v1581 = vpack.c.b16 %v1527, %v1525
        %v1582 = vpack.c.b16 %v1528, %v1526
        %v1583 = vpack.c.b16 %v1531, %v1529
        %v1584 = vpack.c.b16 %v1532, %v1530
        %v1585 = vpack.c.b16 %v1535, %v1533
        %v1586 = vpack.c.b16 %v1536, %v1534
        %v1587 = vpack.c.b16 %v1539, %v1537
        %v1588 = vpack.c.b16 %v1540, %v1538
        %v1589 = vpack.c.b16 %v1543, %v1541
        %v1590 = vpack.c.b16 %v1544, %v1542
        %v1591 = vpack.c.b16 %v1547, %v1545
        %v1592 = vpack.c.b16 %v1548, %v1546
        %v1593 = vpack.c.b16 %v1551, %v1549
        %v1594 = vpack.c.b16 %v1552, %v1550
        %v1595 = vpack.c.b16 %v1555, %v1553
        %v1596 = vpack.c.b16 %v1556, %v1554
        %v1597 = vpack.c.b16 %v1559, %v1557
        %v1598 = vpack.c.b16 %v1560, %v1558
        %v1599 = vpack.c.b16 %v1563, %v1561
        %v1600 = vpack.c.b16 %v1564, %v1562
        %v1601 = vpack.c.b16 %v1567, %v1565
        %v1602 = vpack.c.b16 %v1568, %v1566
        %v1603 = vpack.c.b16 %v1571, %v1569
        %v1604 = vpack.c.b16 %v1572, %v1570
        %1637 = vmatprep.subr.bf16.mxu0 %v1588
        %1638 = vmatpush1.bf16.msra.mxu0 %v1587
        %1639 = vmatprep.subr.bf16.mxu0 %v1586
        %1640 = vmatpush1.bf16.msra.mxu0 %v1585
        %1641 = vmatprep.subr.bf16.mxu0 %v1584
        %1642 = vmatpush1.bf16.msra.mxu0 %v1583
        %1643 = vmatprep.subr.bf16.mxu0 %v1582
        %1644 = vmatpush1.bf16.msra.mxu0 %v1581
        %1645 = vmatprep.subr.bf16.mxu0 %v1580
        %1646 = vmatpush1.bf16.msra.mxu0 %v1579
        %1647 = vmatprep.subr.bf16.mxu0 %v1578
        %1648 = vmatpush1.bf16.msra.mxu0 %v1577
        %1649 = vmatprep.subr.bf16.mxu0 %v1576
        %1650 = vmatpush1.bf16.msra.mxu0 %v1575
        %1651 = vmatprep.subr.bf16.mxu0 %v1574
        %1652 = vmatpush1.bf16.msra.mxu0 %v1573
        %1653 = vmatprep.subr.bf16.mxu0 %v1604
        %1654 = vmatpush2.bf16.msra.mxu0 %v1603
        %1655 = vmatprep.subr.bf16.mxu0 %v1602
        %1656 = vmatpush2.bf16.msra.mxu0 %v1601
        %1657 = vmatprep.subr.bf16.mxu0 %v1600
        %1658 = vmatpush2.bf16.msra.mxu0 %v1599
        %1659 = vmatprep.subr.bf16.mxu0 %v1598
        %1660 = vmatpush2.bf16.msra.mxu0 %v1597
        %1661 = vmatprep.subr.bf16.mxu0 %v1596
        %1662 = vmatpush2.bf16.msra.mxu0 %v1595
        %1663 = vmatprep.subr.bf16.mxu0 %v1594
        %1664 = vmatpush2.bf16.msra.mxu0 %v1593
        %1665 = vmatprep.subr.bf16.mxu0 %v1592
        %1666 = vmatpush2.bf16.msra.mxu0 %v1591
        %1667 = vmatprep.subr.bf16.mxu0 %v1590
        %1668 = vmatpush2.bf16.msra.mxu0 %v1589
        %1669 = vmatprep.mubr.bf16.mxu0 %v1408
        %1670 = vmatmul.mubr.bf16.gmra.mxu0 %v1407
        %v1671 = vpop.f32.mrf.mxu0
        %v1672 = vadd.f32 0.0, %v1671
        %v1673 = vpop.f32.mrf.mxu0
        %v1674 = vadd.f32 0.0, %v1673
        %v1675 = vpop.f32.mrf.mxu0
        %v1676 = vpop.f32.mrf.mxu0
        %1677 = vdwg.mxu0
        %v1679 = vlaneseq
        %v1680 = vshrl.u32 %v1679, 7
        %v1681 = vsub.s32 0, %v1680
        %v1682 = vrot.slane %v1393, %v1681
        %v1683 = vlaneseq
        %v1684 = vshrl.u32 %v1683, 7
        %v1685 = vsub.s32 1, %v1684
        %v1686 = vrot.slane %v1393, %v1685
        %v1689 = vmul.f32 %v1672, %v1682
        %v1690 = vmul.f32 %v1674, %v1686
        %v1723 = vunpack.c.l.b16 %v1412
        %v1724 = vunpack.c.h.b16 %v1412
        %v1725 = vunpack.c.l.b16 %v1413
        %v1726 = vunpack.c.h.b16 %v1413
        %v1727 = vunpack.c.l.b16 %v1414
        %v1728 = vunpack.c.h.b16 %v1414
        %v1729 = vunpack.c.l.b16 %v1415
        %v1730 = vunpack.c.h.b16 %v1415
        %v1731 = vunpack.c.l.b16 %v1416
        %v1732 = vunpack.c.h.b16 %v1416
        %v1733 = vunpack.c.l.b16 %v1417
        %v1734 = vunpack.c.h.b16 %v1417
        %v1735 = vunpack.c.l.b16 %v1418
        %v1736 = vunpack.c.h.b16 %v1418
        %v1737 = vunpack.c.l.b16 %v1419
        %v1738 = vunpack.c.h.b16 %v1419
        %v1739 = vunpack.c.l.b16 %v1420
        %v1740 = vunpack.c.h.b16 %v1420
        %v1741 = vunpack.c.l.b16 %v1421
        %v1742 = vunpack.c.h.b16 %v1421
        %v1743 = vunpack.c.l.b16 %v1422
        %v1744 = vunpack.c.h.b16 %v1422
        %v1745 = vunpack.c.l.b16 %v1423
        %v1746 = vunpack.c.h.b16 %v1423
        %v1747 = vunpack.c.l.b16 %v1424
        %v1748 = vunpack.c.h.b16 %v1424
        %v1749 = vunpack.c.l.b16 %v1425
        %v1750 = vunpack.c.h.b16 %v1425
        %v1751 = vunpack.c.l.b16 %v1426
        %v1752 = vunpack.c.h.b16 %v1426
        %v1753 = vunpack.c.l.b16 %v1427
        %v1754 = vunpack.c.h.b16 %v1427
        %v1755 = vunpack.c.l.b16 %v1428
        %v1756 = vunpack.c.h.b16 %v1428
        %v1757 = vunpack.c.l.b16 %v1429
        %v1758 = vunpack.c.h.b16 %v1429
        %v1759 = vunpack.c.l.b16 %v1430
        %v1760 = vunpack.c.h.b16 %v1430
        %v1761 = vunpack.c.l.b16 %v1431
        %v1762 = vunpack.c.h.b16 %v1431
        %v1763 = vunpack.c.l.b16 %v1432
        %v1764 = vunpack.c.h.b16 %v1432
        %v1765 = vunpack.c.l.b16 %v1433
        %v1766 = vunpack.c.h.b16 %v1433
        %v1767 = vunpack.c.l.b16 %v1434
        %v1768 = vunpack.c.h.b16 %v1434
        %v1769 = vunpack.c.l.b16 %v1435
        %v1770 = vunpack.c.h.b16 %v1435
        %v1771 = vunpack.c.l.b16 %v1436
        %v1772 = vunpack.c.h.b16 %v1436
        %v1773 = vunpack.c.l.b16 %v1437
        %v1774 = vunpack.c.h.b16 %v1437
        %v1775 = vunpack.c.l.b16 %v1438
        %v1776 = vunpack.c.h.b16 %v1438
        %v1777 = vunpack.c.l.b16 %v1439
        %v1778 = vunpack.c.h.b16 %v1439
        %v1779 = vunpack.c.l.b16 %v1440
        %v1780 = vunpack.c.h.b16 %v1440
        %v1781 = vunpack.c.l.b16 %v1441
        %v1782 = vunpack.c.h.b16 %v1441
        %v1783 = vunpack.c.l.b16 %v1442
        %v1784 = vunpack.c.h.b16 %v1442
        %v1785 = vunpack.c.l.b16 %v1443
        %v1786 = vunpack.c.h.b16 %v1443
        %v1787 = vpack.c.b16 %v1725, %v1723
        %v1788 = vpack.c.b16 %v1726, %v1724
        %v1789 = vpack.c.b16 %v1729, %v1727
        %v1790 = vpack.c.b16 %v1730, %v1728
        %v1791 = vpack.c.b16 %v1733, %v1731
        %v1792 = vpack.c.b16 %v1734, %v1732
        %v1793 = vpack.c.b16 %v1737, %v1735
        %v1794 = vpack.c.b16 %v1738, %v1736
        %v1795 = vpack.c.b16 %v1741, %v1739
        %v1796 = vpack.c.b16 %v1742, %v1740
        %v1797 = vpack.c.b16 %v1745, %v1743
        %v1798 = vpack.c.b16 %v1746, %v1744
        %v1799 = vpack.c.b16 %v1749, %v1747
        %v1800 = vpack.c.b16 %v1750, %v1748
        %v1801 = vpack.c.b16 %v1753, %v1751
        %v1802 = vpack.c.b16 %v1754, %v1752
        %v1803 = vpack.c.b16 %v1757, %v1755
        %v1804 = vpack.c.b16 %v1758, %v1756
        %v1805 = vpack.c.b16 %v1761, %v1759
        %v1806 = vpack.c.b16 %v1762, %v1760
        %v1807 = vpack.c.b16 %v1765, %v1763
        %v1808 = vpack.c.b16 %v1766, %v1764
        %v1809 = vpack.c.b16 %v1769, %v1767
        %v1810 = vpack.c.b16 %v1770, %v1768
        %v1811 = vpack.c.b16 %v1773, %v1771
        %v1812 = vpack.c.b16 %v1774, %v1772
        %v1813 = vpack.c.b16 %v1777, %v1775
        %v1814 = vpack.c.b16 %v1778, %v1776
        %v1815 = vpack.c.b16 %v1781, %v1779
        %v1816 = vpack.c.b16 %v1782, %v1780
        %v1817 = vpack.c.b16 %v1785, %v1783
        %v1818 = vpack.c.b16 %v1786, %v1784
        %1851 = vmatprep.subr.bf16.mxu0 %v1802
        %1852 = vmatpush1.bf16.msra.mxu0 %v1801
        %1853 = vmatprep.subr.bf16.mxu0 %v1800
        %1854 = vmatpush1.bf16.msra.mxu0 %v1799
        %1855 = vmatprep.subr.bf16.mxu0 %v1798
        %1856 = vmatpush1.bf16.msra.mxu0 %v1797
        %1857 = vmatprep.subr.bf16.mxu0 %v1796
        %1858 = vmatpush1.bf16.msra.mxu0 %v1795
        %1859 = vmatprep.subr.bf16.mxu0 %v1794
        %1860 = vmatpush1.bf16.msra.mxu0 %v1793
        %1861 = vmatprep.subr.bf16.mxu0 %v1792
        %1862 = vmatpush1.bf16.msra.mxu0 %v1791
        %1863 = vmatprep.subr.bf16.mxu0 %v1790
        %1864 = vmatpush1.bf16.msra.mxu0 %v1789
        %1865 = vmatprep.subr.bf16.mxu0 %v1788
        %1866 = vmatpush1.bf16.msra.mxu0 %v1787
        %1867 = vmatprep.subr.bf16.mxu0 %v1818
        %1868 = vmatpush2.bf16.msra.mxu0 %v1817
        %1869 = vmatprep.subr.bf16.mxu0 %v1816
        %1870 = vmatpush2.bf16.msra.mxu0 %v1815
        %1871 = vmatprep.subr.bf16.mxu0 %v1814
        %1872 = vmatpush2.bf16.msra.mxu0 %v1813
        %1873 = vmatprep.subr.bf16.mxu0 %v1812
        %1874 = vmatpush2.bf16.msra.mxu0 %v1811
        %1875 = vmatprep.subr.bf16.mxu0 %v1810
        %1876 = vmatpush2.bf16.msra.mxu0 %v1809
        %1877 = vmatprep.subr.bf16.mxu0 %v1808
        %1878 = vmatpush2.bf16.msra.mxu0 %v1807
        %1879 = vmatprep.subr.bf16.mxu0 %v1806
        %1880 = vmatpush2.bf16.msra.mxu0 %v1805
        %1881 = vmatprep.subr.bf16.mxu0 %v1804
        %1882 = vmatpush2.bf16.msra.mxu0 %v1803
        %1883 = vmatprep.mubr.bf16.mxu0 %v1410
        %1884 = vmatmul.mubr.bf16.gmra.mxu0 %v1409
        %v1885 = vpop.f32.mrf.mxu0
        %v1886 = vadd.f32 %v1689, %v1885
        %v1887 = vpop.f32.mrf.mxu0
        %v1888 = vadd.f32 %v1690, %v1887
        %v1889 = vpop.f32.mrf.mxu0
        %v1890 = vpop.f32.mrf.mxu0
        %1891 = vdwg.mxu0
        %s1892 = scalar_lea.vmem %s1199, 6
        %v1893 = vld [vmem:[%s1892] ss:$8 sm:$0x3]
        %v1895 = vlaneseq
        %v1896 = vshrl.u32 %v1895, 7
        %v1897 = vsub.s32 0, %v1896
        %v1898 = vrot.slane %v1893, %v1897
        %v1899 = vlaneseq
        %v1900 = vshrl.u32 %v1899, 7
        %v1901 = vsub.s32 1, %v1900
        %v1902 = vrot.slane %v1893, %v1901
        %v1905 = vadd.f32 %v1886, %v1898
        %v1906 = vadd.f32 %v1888, %v1902
        %s1907 = scalar_lea.vmem %s1199, 7
        %v1908 = vld [vmem:[%s1907] ss:$8 sm:$0x3]
        %v1909 = vmul.f32 %v1908, %v1393
        %v1911 = vlaneseq
        %v1912 = vshrl.u32 %v1911, 7
        %v1913 = vsub.s32 0, %v1912
        %v1914 = vrot.slane %v1909, %v1913
        %v1915 = vlaneseq
        %v1916 = vshrl.u32 %v1915, 7
        %v1917 = vsub.s32 1, %v1916
        %v1918 = vrot.slane %v1909, %v1917
        %v1921 = vadd.f32 %v1905, %v1914
        %v1922 = vadd.f32 %v1906, %v1918
        %v1923 = vmax.f32 %v1921, 0.0
        %v1924 = vmax.f32 %v1922, 0.0
        %s1925 = scalar_lea.vmem %s1199, 3
        %v1926 = vld [vmem:[%s1925] ss:$8 sm:$0x3]
        %s1927 = scalar_lea.vmem %s1199, 16
        %v1928 = vld [vmem:[%s1927] ss:$8 sm:$0x3]
        %1930 = vrot.lane.b32.xlu0 %v1928, 2
        %v1931 = vpop.permute.xlu0 %1930
        %v1933 = vmul.f32 %v1928, %v1931
        %1935 = vrot.lane.b32.xlu0 %v1933, 127
        %v1936 = vpop.permute.xlu0 %1935
        %v1938 = vadd.f32 %v1928, %v1936
        %s1939 = scalar_lea.vmem %s381, 4
        %v1940 = vld [vmem:[%s1939] sm:$0x3]
        %v1941 = vunpack.c.l.bf16 %v1940
        %s1942 = scalar_lea.vmem %s381, 6
        %v1943 = vld [vmem:[%s1942] sm:$0x3]
        %v1944 = vunpack.c.l.bf16 %v1943
        %1945 = vset.pattern.permute.xlu0 0
        %1946 = vperm.xlu0 %1945, %v1928
        %v1947 = vpop.permute.xlu0 %1946
        %v1949 = vlaneseq
        %v1950 = vshrl.u32 %v1949, 7
        %v1951 = vsub.s32 0, %v1950
        %v1952 = vrot.slane %v1947, %v1951
        %v1953 = vmul.f32 %v1926, %v1952
        %v1956 = vunpack.c.l.s4 857870592
        %v1957 = vunpack.c.0.s8 %v1956
        %v1958 = vlaneseq
        %v1959 = vshrl.u32 %v1958, 7
        %v1960 = vsub.s32 %v1957, %v1959
        %v1961 = vrot.slane %v1953, %v1960
        %v1963 = vmul.f32 %v1944, %v1961
        %v1964 = vadd.f32 %v1941, %v1963
        %v1966 = vlaneseq
        %v1967 = vshrl.u32 %v1966, 7
        %v1968 = vsub.s32 0, %v1967
        %v1969 = vrot.slane %v1964, %v1968
        %v1970 = vlaneseq
        %v1971 = vshrl.u32 %v1970, 7
        %v1972 = vsub.s32 2, %v1971
        %v1973 = vrot.slane %v1964, %v1972
        %v1976 = vlaneseq
        %v1977 = vshrl.u32 %v1976, 7
        %v1978 = vsub.s32 0, %v1977
        %v1979 = vrot.slane %v1969, %v1978
        %v1980 = vlaneseq
        %v1981 = vshrl.u32 %v1980, 7
        %v1982 = vsub.s32 0, %v1981
        %v1983 = vrot.slane %v1973, %v1982
        %v1984 = vmul.f32 %v1923, %v1979
        %v1985 = vmul.f32 %v1924, %v1983
        %v1986 = vadd.f32 %v1984, %v1985
        %1987 = vadd.xlane.f32.xlu0 %v1986
        %v1988 = vpop.xlane.xlu0 %1987
        %v1990 = vlaneseq
        %v1991 = vshrl.u32 %v1990, 7
        %v1992 = vsub.s32 0, %v1991
        %v1993 = vrot.slane %v1938, %v1992
        %v1995 = vadd.f32 %v1988, %v1993
        %s1996 = scalar_lea.vmem %s319, 2 [#allocation6]
        %v1997 = vld [vmem:[%s1996] sm:$0x1]
        %s1998 = scalar_lea.vmem %s389, 64
        %v1999 = vld [vmem:[%s1998] ss:$8 sm:$0x3]
        %v2001 = vlaneseq
        %v2002 = vshrl.u32 %v2001, 7
        %v2003 = vsub.s32 0, %v2002
        %v2004 = vrot.slane %v1997, %v2003
        %v2006 = vmul.f32 %v396, %v2004
        %v2007 = vpack.c.bf16 %v2006, %v2006
        %s2008 = scalar_lea.vmem %s374, 96
        %v2009 = vld [vmem:[%s2008] sm:$0xff]
        %v2010 = vld [vmem:[%s2008 + $0x8] sm:$0xff]
        %v2011 = vld [vmem:[%s2008 + $0x10] sm:$0x33]
        %s2012 = scalar_lea.vmem %s374, 120
        %v2013 = vld [vmem:[%s2012] sm:$0xff]
        %v2014 = vld [vmem:[%s2012 + $0x8] sm:$0xff]
        %v2015 = vld [vmem:[%s2012 + $0x10] sm:$0x33]
        %v2019 = vunpack.c.l.b16 %v2013
        %v2020 = vunpack.c.h.b16 %v2013
        %v2021 = vunpack.c.l.b16 %v2014
        %v2022 = vunpack.c.h.b16 %v2014
        %v2023 = vunpack.c.l.b16 %v2015
        %v2024 = vunpack.c.h.b16 %v2015
        %v2025 = vpack.c.b16 %v2021, %v2019
        %v2026 = vpack.c.b16 %v2022, %v2020
        %v2027 = vpack.c.b16 %v2023, %v2023
        %v2028 = vpack.c.b16 %v2024, %v2024
        %v2032 = vsel %vm430, %v2007, 0
        %v2035 = vsel %vm434, %v2027, 0
        %v2038 = vsel %vm434, %v2028, 0
        %2040 = vmatprep.subr.bf16.mxu0 0
        %2041 = vmatpush1.bf16.msra.mxu0 0
        %2042 = vmatprep.subr.bf16.mxu0 0
        %2043 = vmatpush1.bf16.msra.mxu0 0
        %2044 = vmatprep.subr.bf16.mxu0 0
        %2045 = vmatpush1.bf16.msra.mxu0 0
        %2046 = vmatprep.subr.bf16.mxu0 0
        %2047 = vmatpush1.bf16.msra.mxu0 0
        %2048 = vmatprep.subr.bf16.mxu0 0
        %2049 = vmatpush1.bf16.msra.mxu0 0
        %2050 = vmatprep.subr.bf16.mxu0 0
        %2051 = vmatpush1.bf16.msra.mxu0 0
        %2052 = vmatprep.subr.bf16.mxu0 %v2038
        %2053 = vmatpush1.bf16.msra.mxu0 %v2035
        %2054 = vmatprep.subr.bf16.mxu0 %v2026
        %2055 = vmatpush1.bf16.msra.mxu0 %v2025
        %2056 = vmatprep.subr.bf16.mxu0 0
        %2057 = vmatpush2.bf16.msra.mxu0 0
        %2058 = vmatprep.subr.bf16.mxu0 0
        %2059 = vmatpush2.bf16.msra.mxu0 0
        %2060 = vmatprep.subr.bf16.mxu0 0
        %2061 = vmatpush2.bf16.msra.mxu0 0
        %2062 = vmatprep.subr.bf16.mxu0 0
        %2063 = vmatpush2.bf16.msra.mxu0 0
        %2064 = vmatprep.subr.bf16.mxu0 0
        %2065 = vmatpush2.bf16.msra.mxu0 0
        %2066 = vmatprep.subr.bf16.mxu0 0
        %2067 = vmatpush2.bf16.msra.mxu0 0
        %2068 = vmatprep.subr.bf16.mxu0 0
        %2069 = vmatpush2.bf16.msra.mxu0 0
        %2070 = vmatprep.subr.bf16.mxu0 0
        %2071 = vmatpush2.bf16.msra.mxu0 0
        %2072 = vmatprep.mubr.bf16.mxu0 0
        %2073 = vmatmul.mubr.bf16.gmra.mxu0 %v2032
        %v2074 = vpop.f32.mrf.mxu0
        %v2075 = vadd.f32 0.0, %v2074
        %v2076 = vpop.f32.mrf.mxu0
        %v2077 = vadd.f32 0.0, %v2076
        %v2078 = vpop.f32.mrf.mxu0
        %v2079 = vpop.f32.mrf.mxu0
        %2080 = vdwg.mxu0
        %v2082 = vlaneseq
        %v2083 = vshrl.u32 %v2082, 7
        %v2084 = vsub.s32 0, %v2083
        %v2085 = vrot.slane %v1999, %v2084
        %v2086 = vlaneseq
        %v2087 = vshrl.u32 %v2086, 7
        %v2088 = vsub.s32 1, %v2087
        %v2089 = vrot.slane %v1999, %v2088
        %v2092 = vmul.f32 %v2075, %v2085
        %v2093 = vmul.f32 %v2077, %v2089
        %v2097 = vunpack.c.l.b16 %v2009
        %v2098 = vunpack.c.h.b16 %v2009
        %v2099 = vunpack.c.l.b16 %v2010
        %v2100 = vunpack.c.h.b16 %v2010
        %v2101 = vunpack.c.l.b16 %v2011
        %v2102 = vunpack.c.h.b16 %v2011
        %v2103 = vpack.c.b16 %v2099, %v2097
        %v2104 = vpack.c.b16 %v2100, %v2098
        %v2105 = vpack.c.b16 %v2101, %v2101
        %v2106 = vpack.c.b16 %v2102, %v2102
        %v2110 = vsel %vm434, %v2105, 0
        %v2113 = vsel %vm434, %v2106, 0
        %2115 = vmatprep.subr.bf16.mxu0 0
        %2116 = vmatpush1.bf16.msra.mxu0 0
        %2117 = vmatprep.subr.bf16.mxu0 0
        %2118 = vmatpush1.bf16.msra.mxu0 0
        %2119 = vmatprep.subr.bf16.mxu0 0
        %2120 = vmatpush1.bf16.msra.mxu0 0
        %2121 = vmatprep.subr.bf16.mxu0 0
        %2122 = vmatpush1.bf16.msra.mxu0 0
        %2123 = vmatprep.subr.bf16.mxu0 0
        %2124 = vmatpush1.bf16.msra.mxu0 0
        %2125 = vmatprep.subr.bf16.mxu0 0
        %2126 = vmatpush1.bf16.msra.mxu0 0
        %2127 = vmatprep.subr.bf16.mxu0 %v2113
        %2128 = vmatpush1.bf16.msra.mxu0 %v2110
        %2129 = vmatprep.subr.bf16.mxu0 %v2104
        %2130 = vmatpush1.bf16.msra.mxu0 %v2103
        %2131 = vmatprep.subr.bf16.mxu0 0
        %2132 = vmatpush2.bf16.msra.mxu0 0
        %2133 = vmatprep.subr.bf16.mxu0 0
        %2134 = vmatpush2.bf16.msra.mxu0 0
        %2135 = vmatprep.subr.bf16.mxu0 0
        %2136 = vmatpush2.bf16.msra.mxu0 0
        %2137 = vmatprep.subr.bf16.mxu0 0
        %2138 = vmatpush2.bf16.msra.mxu0 0
        %2139 = vmatprep.subr.bf16.mxu0 0
        %2140 = vmatpush2.bf16.msra.mxu0 0
        %2141 = vmatprep.subr.bf16.mxu0 0
        %2142 = vmatpush2.bf16.msra.mxu0 0
        %2143 = vmatprep.subr.bf16.mxu0 0
        %2144 = vmatpush2.bf16.msra.mxu0 0
        %2145 = vmatprep.subr.bf16.mxu0 0
        %2146 = vmatpush2.bf16.msra.mxu0 0
        %2147 = vmatprep.mubr.bf16.mxu0 0
        %2148 = vmatmul.mubr.bf16.gmra.mxu0 %v511
        %v2149 = vpop.f32.mrf.mxu0
        %v2150 = vadd.f32 %v2092, %v2149
        %v2151 = vpop.f32.mrf.mxu0
        %v2152 = vadd.f32 %v2093, %v2151
        %v2153 = vpop.f32.mrf.mxu0
        %v2154 = vpop.f32.mrf.mxu0
        %2155 = vdwg.mxu0
        %s2156 = scalar_lea.vmem %s1998, 4
        %v2157 = vld [vmem:[%s2156] ss:$8 sm:$0x3]
        %v2159 = vlaneseq
        %v2160 = vshrl.u32 %v2159, 7
        %v2161 = vsub.s32 0, %v2160
        %v2162 = vrot.slane %v2157, %v2161
        %v2163 = vlaneseq
        %v2164 = vshrl.u32 %v2163, 7
        %v2165 = vsub.s32 1, %v2164
        %v2166 = vrot.slane %v2157, %v2165
        %v2169 = vadd.f32 %v2150, %v2162
        %v2170 = vadd.f32 %v2152, %v2166
        %s2171 = scalar_lea.vmem %s1998, 5
        %v2172 = vld [vmem:[%s2171] ss:$8 sm:$0x3]
        %v2173 = vmul.f32 %v2172, %v1999
        %v2175 = vlaneseq
        %v2176 = vshrl.u32 %v2175, 7
        %v2177 = vsub.s32 0, %v2176
        %v2178 = vrot.slane %v2173, %v2177
        %v2179 = vlaneseq
        %v2180 = vshrl.u32 %v2179, 7
        %v2181 = vsub.s32 1, %v2180
        %v2182 = vrot.slane %v2173, %v2181
        %v2185 = vadd.f32 %v2169, %v2178
        %v2186 = vadd.f32 %v2170, %v2182
        %v2187 = vmax.f32 %v2185, 0.0
        %v2188 = vmax.f32 %v2186, 0.0
        %s2189 = scalar_lea.vmem %s1998, 1
        %v2190 = vld [vmem:[%s2189] ss:$8 sm:$0x3]
        %s2191 = scalar_lea.vmem %s1998, 2
        %v2192 = vld [vmem:[%s2191] ss:$8 sm:$0x3]
        %v2194 = vlaneseq
        %v2195 = vshrl.u32 %v2194, 7
        %v2196 = vsub.s32 0, %v2195
        %v2197 = vrot.slane %v2190, %v2196
        %v2198 = vlaneseq
        %v2199 = vshrl.u32 %v2198, 7
        %v2200 = vsub.s32 1, %v2199
        %v2201 = vrot.slane %v2190, %v2200
        %v2204 = vmul.f32 %v2187, %v2197
        %v2205 = vmul.f32 %v2188, %v2201
        %v2206 = vpack.c.bf16 %v2204, %v2204
        %v2207 = vpack.c.bf16 %v2205, %v2205
        %v2208 = vpack.c.bf16 %v2187, %v2187
        %v2209 = vpack.c.bf16 %v2188, %v2188
        %s2210 = scalar_lea.vmem %s310, 1024 [#allocation4]
        %v2211 = vld [vmem:[%s2210] sm:$0xff]
        %v2212 = vld [vmem:[%s2210 + $0x8] sm:$0xff]
        %v2213 = vld [vmem:[%s2210 + $0x10] sm:$0xff]
        %v2214 = vld [vmem:[%s2210 + $0x18] sm:$0xff]
        %v2215 = vld [vmem:[%s2210 + $0x20] sm:$0xff]
        %v2216 = vld [vmem:[%s2210 + $0x28] sm:$0xff]
        %v2217 = vld [vmem:[%s2210 + $0x30] sm:$0xff]
        %v2218 = vld [vmem:[%s2210 + $0x38] sm:$0xff]
        %v2219 = vld [vmem:[%s2210 + $0x40] sm:$0xff]
        %v2220 = vld [vmem:[%s2210 + $0x48] sm:$0xff]
        %v2221 = vld [vmem:[%s2210 + $0x50] sm:$0xff]
        %v2222 = vld [vmem:[%s2210 + $0x58] sm:$0xff]
        %v2223 = vld [vmem:[%s2210 + $0x60] sm:$0xff]
        %v2224 = vld [vmem:[%s2210 + $0x68] sm:$0xff]
        %v2225 = vld [vmem:[%s2210 + $0x70] sm:$0xff]
        %v2226 = vld [vmem:[%s2210 + $0x78] sm:$0xff]
        %v2227 = vld [vmem:[%s2210 + $0x80] sm:$0xff]
        %v2228 = vld [vmem:[%s2210 + $0x88] sm:$0xff]
        %v2229 = vld [vmem:[%s2210 + $0x90] sm:$0xff]
        %v2230 = vld [vmem:[%s2210 + $0x98] sm:$0xff]
        %v2231 = vld [vmem:[%s2210 + $0xa0] sm:$0xff]
        %v2232 = vld [vmem:[%s2210 + $0xa8] sm:$0xff]
        %v2233 = vld [vmem:[%s2210 + $0xb0] sm:$0xff]
        %v2234 = vld [vmem:[%s2210 + $0xb8] sm:$0xff]
        %v2235 = vld [vmem:[%s2210 + $0xc0] sm:$0xff]
        %v2236 = vld [vmem:[%s2210 + $0xc8] sm:$0xff]
        %v2237 = vld [vmem:[%s2210 + $0xd0] sm:$0xff]
        %v2238 = vld [vmem:[%s2210 + $0xd8] sm:$0xff]
        %v2239 = vld [vmem:[%s2210 + $0xe0] sm:$0xff]
        %v2240 = vld [vmem:[%s2210 + $0xe8] sm:$0xff]
        %v2241 = vld [vmem:[%s2210 + $0xf0] sm:$0xff]
        %v2242 = vld [vmem:[%s2210 + $0xf8] sm:$0xff]
        %s2243 = scalar_lea.vmem %s310, 1280 [#allocation4]
        %v2244 = vld [vmem:[%s2243] sm:$0xff]
        %v2245 = vld [vmem:[%s2243 + $0x8] sm:$0xff]
        %v2246 = vld [vmem:[%s2243 + $0x10] sm:$0xff]
        %v2247 = vld [vmem:[%s2243 + $0x18] sm:$0xff]
        %v2248 = vld [vmem:[%s2243 + $0x20] sm:$0xff]
        %v2249 = vld [vmem:[%s2243 + $0x28] sm:$0xff]
        %v2250 = vld [vmem:[%s2243 + $0x30] sm:$0xff]
        %v2251 = vld [vmem:[%s2243 + $0x38] sm:$0xff]
        %v2252 = vld [vmem:[%s2243 + $0x40] sm:$0xff]
        %v2253 = vld [vmem:[%s2243 + $0x48] sm:$0xff]
        %v2254 = vld [vmem:[%s2243 + $0x50] sm:$0xff]
        %v2255 = vld [vmem:[%s2243 + $0x58] sm:$0xff]
        %v2256 = vld [vmem:[%s2243 + $0x60] sm:$0xff]
        %v2257 = vld [vmem:[%s2243 + $0x68] sm:$0xff]
        %v2258 = vld [vmem:[%s2243 + $0x70] sm:$0xff]
        %v2259 = vld [vmem:[%s2243 + $0x78] sm:$0xff]
        %v2260 = vld [vmem:[%s2243 + $0x80] sm:$0xff]
        %v2261 = vld [vmem:[%s2243 + $0x88] sm:$0xff]
        %v2262 = vld [vmem:[%s2243 + $0x90] sm:$0xff]
        %v2263 = vld [vmem:[%s2243 + $0x98] sm:$0xff]
        %v2264 = vld [vmem:[%s2243 + $0xa0] sm:$0xff]
        %v2265 = vld [vmem:[%s2243 + $0xa8] sm:$0xff]
        %v2266 = vld [vmem:[%s2243 + $0xb0] sm:$0xff]
        %v2267 = vld [vmem:[%s2243 + $0xb8] sm:$0xff]
        %v2268 = vld [vmem:[%s2243 + $0xc0] sm:$0xff]
        %v2269 = vld [vmem:[%s2243 + $0xc8] sm:$0xff]
        %v2270 = vld [vmem:[%s2243 + $0xd0] sm:$0xff]
        %v2271 = vld [vmem:[%s2243 + $0xd8] sm:$0xff]
        %v2272 = vld [vmem:[%s2243 + $0xe0] sm:$0xff]
        %v2273 = vld [vmem:[%s2243 + $0xe8] sm:$0xff]
        %v2274 = vld [vmem:[%s2243 + $0xf0] sm:$0xff]
        %v2275 = vld [vmem:[%s2243 + $0xf8] sm:$0xff]
        %v2308 = vunpack.c.l.b16 %v2244
        %v2309 = vunpack.c.h.b16 %v2244
        %v2310 = vunpack.c.l.b16 %v2245
        %v2311 = vunpack.c.h.b16 %v2245
        %v2312 = vunpack.c.l.b16 %v2246
        %v2313 = vunpack.c.h.b16 %v2246
        %v2314 = vunpack.c.l.b16 %v2247
        %v2315 = vunpack.c.h.b16 %v2247
        %v2316 = vunpack.c.l.b16 %v2248
        %v2317 = vunpack.c.h.b16 %v2248
        %v2318 = vunpack.c.l.b16 %v2249
        %v2319 = vunpack.c.h.b16 %v2249
        %v2320 = vunpack.c.l.b16 %v2250
        %v2321 = vunpack.c.h.b16 %v2250
        %v2322 = vunpack.c.l.b16 %v2251
        %v2323 = vunpack.c.h.b16 %v2251
        %v2324 = vunpack.c.l.b16 %v2252
        %v2325 = vunpack.c.h.b16 %v2252
        %v2326 = vunpack.c.l.b16 %v2253
        %v2327 = vunpack.c.h.b16 %v2253
        %v2328 = vunpack.c.l.b16 %v2254
        %v2329 = vunpack.c.h.b16 %v2254
        %v2330 = vunpack.c.l.b16 %v2255
        %v2331 = vunpack.c.h.b16 %v2255
        %v2332 = vunpack.c.l.b16 %v2256
        %v2333 = vunpack.c.h.b16 %v2256
        %v2334 = vunpack.c.l.b16 %v2257
        %v2335 = vunpack.c.h.b16 %v2257
        %v2336 = vunpack.c.l.b16 %v2258
        %v2337 = vunpack.c.h.b16 %v2258
        %v2338 = vunpack.c.l.b16 %v2259
        %v2339 = vunpack.c.h.b16 %v2259
        %v2340 = vunpack.c.l.b16 %v2260
        %v2341 = vunpack.c.h.b16 %v2260
        %v2342 = vunpack.c.l.b16 %v2261
        %v2343 = vunpack.c.h.b16 %v2261
        %v2344 = vunpack.c.l.b16 %v2262
        %v2345 = vunpack.c.h.b16 %v2262
        %v2346 = vunpack.c.l.b16 %v2263
        %v2347 = vunpack.c.h.b16 %v2263
        %v2348 = vunpack.c.l.b16 %v2264
        %v2349 = vunpack.c.h.b16 %v2264
        %v2350 = vunpack.c.l.b16 %v2265
        %v2351 = vunpack.c.h.b16 %v2265
        %v2352 = vunpack.c.l.b16 %v2266
        %v2353 = vunpack.c.h.b16 %v2266
        %v2354 = vunpack.c.l.b16 %v2267
        %v2355 = vunpack.c.h.b16 %v2267
        %v2356 = vunpack.c.l.b16 %v2268
        %v2357 = vunpack.c.h.b16 %v2268
        %v2358 = vunpack.c.l.b16 %v2269
        %v2359 = vunpack.c.h.b16 %v2269
        %v2360 = vunpack.c.l.b16 %v2270
        %v2361 = vunpack.c.h.b16 %v2270
        %v2362 = vunpack.c.l.b16 %v2271
        %v2363 = vunpack.c.h.b16 %v2271
        %v2364 = vunpack.c.l.b16 %v2272
        %v2365 = vunpack.c.h.b16 %v2272
        %v2366 = vunpack.c.l.b16 %v2273
        %v2367 = vunpack.c.h.b16 %v2273
        %v2368 = vunpack.c.l.b16 %v2274
        %v2369 = vunpack.c.h.b16 %v2274
        %v2370 = vunpack.c.l.b16 %v2275
        %v2371 = vunpack.c.h.b16 %v2275
        %v2372 = vpack.c.b16 %v2310, %v2308
        %v2373 = vpack.c.b16 %v2311, %v2309
        %v2374 = vpack.c.b16 %v2314, %v2312
        %v2375 = vpack.c.b16 %v2315, %v2313
        %v2376 = vpack.c.b16 %v2318, %v2316
        %v2377 = vpack.c.b16 %v2319, %v2317
        %v2378 = vpack.c.b16 %v2322, %v2320
        %v2379 = vpack.c.b16 %v2323, %v2321
        %v2380 = vpack.c.b16 %v2326, %v2324
        %v2381 = vpack.c.b16 %v2327, %v2325
        %v2382 = vpack.c.b16 %v2330, %v2328
        %v2383 = vpack.c.b16 %v2331, %v2329
        %v2384 = vpack.c.b16 %v2334, %v2332
        %v2385 = vpack.c.b16 %v2335, %v2333
        %v2386 = vpack.c.b16 %v2338, %v2336
        %v2387 = vpack.c.b16 %v2339, %v2337
        %v2388 = vpack.c.b16 %v2342, %v2340
        %v2389 = vpack.c.b16 %v2343, %v2341
        %v2390 = vpack.c.b16 %v2346, %v2344
        %v2391 = vpack.c.b16 %v2347, %v2345
        %v2392 = vpack.c.b16 %v2350, %v2348
        %v2393 = vpack.c.b16 %v2351, %v2349
        %v2394 = vpack.c.b16 %v2354, %v2352
        %v2395 = vpack.c.b16 %v2355, %v2353
        %v2396 = vpack.c.b16 %v2358, %v2356
        %v2397 = vpack.c.b16 %v2359, %v2357
        %v2398 = vpack.c.b16 %v2362, %v2360
        %v2399 = vpack.c.b16 %v2363, %v2361
        %v2400 = vpack.c.b16 %v2366, %v2364
        %v2401 = vpack.c.b16 %v2367, %v2365
        %v2402 = vpack.c.b16 %v2370, %v2368
        %v2403 = vpack.c.b16 %v2371, %v2369
        %2436 = vmatprep.subr.bf16.mxu0 %v2387
        %2437 = vmatpush1.bf16.msra.mxu0 %v2386
        %2438 = vmatprep.subr.bf16.mxu0 %v2385
        %2439 = vmatpush1.bf16.msra.mxu0 %v2384
        %2440 = vmatprep.subr.bf16.mxu0 %v2383
        %2441 = vmatpush1.bf16.msra.mxu0 %v2382
        %2442 = vmatprep.subr.bf16.mxu0 %v2381
        %2443 = vmatpush1.bf16.msra.mxu0 %v2380
        %2444 = vmatprep.subr.bf16.mxu0 %v2379
        %2445 = vmatpush1.bf16.msra.mxu0 %v2378
        %2446 = vmatprep.subr.bf16.mxu0 %v2377
        %2447 = vmatpush1.bf16.msra.mxu0 %v2376
        %2448 = vmatprep.subr.bf16.mxu0 %v2375
        %2449 = vmatpush1.bf16.msra.mxu0 %v2374
        %2450 = vmatprep.subr.bf16.mxu0 %v2373
        %2451 = vmatpush1.bf16.msra.mxu0 %v2372
        %2452 = vmatprep.subr.bf16.mxu0 %v2403
        %2453 = vmatpush2.bf16.msra.mxu0 %v2402
        %2454 = vmatprep.subr.bf16.mxu0 %v2401
        %2455 = vmatpush2.bf16.msra.mxu0 %v2400
        %2456 = vmatprep.subr.bf16.mxu0 %v2399
        %2457 = vmatpush2.bf16.msra.mxu0 %v2398
        %2458 = vmatprep.subr.bf16.mxu0 %v2397
        %2459 = vmatpush2.bf16.msra.mxu0 %v2396
        %2460 = vmatprep.subr.bf16.mxu0 %v2395
        %2461 = vmatpush2.bf16.msra.mxu0 %v2394
        %2462 = vmatprep.subr.bf16.mxu0 %v2393
        %2463 = vmatpush2.bf16.msra.mxu0 %v2392
        %2464 = vmatprep.subr.bf16.mxu0 %v2391
        %2465 = vmatpush2.bf16.msra.mxu0 %v2390
        %2466 = vmatprep.subr.bf16.mxu0 %v2389
        %2467 = vmatpush2.bf16.msra.mxu0 %v2388
        %2468 = vmatprep.mubr.bf16.mxu0 %v2207
        %2469 = vmatmul.mubr.bf16.gmra.mxu0 %v2206
        %v2470 = vpop.f32.mrf.mxu0
        %v2471 = vadd.f32 0.0, %v2470
        %v2472 = vpop.f32.mrf.mxu0
        %v2473 = vadd.f32 0.0, %v2472
        %v2474 = vpop.f32.mrf.mxu0
        %v2475 = vpop.f32.mrf.mxu0
        %2476 = vdwg.mxu0
        %v2478 = vlaneseq
        %v2479 = vshrl.u32 %v2478, 7
        %v2480 = vsub.s32 0, %v2479
        %v2481 = vrot.slane %v2192, %v2480
        %v2482 = vlaneseq
        %v2483 = vshrl.u32 %v2482, 7
        %v2484 = vsub.s32 1, %v2483
        %v2485 = vrot.slane %v2192, %v2484
        %v2488 = vmul.f32 %v2471, %v2481
        %v2489 = vmul.f32 %v2473, %v2485
        %v2522 = vunpack.c.l.b16 %v2211
        %v2523 = vunpack.c.h.b16 %v2211
        %v2524 = vunpack.c.l.b16 %v2212
        %v2525 = vunpack.c.h.b16 %v2212
        %v2526 = vunpack.c.l.b16 %v2213
        %v2527 = vunpack.c.h.b16 %v2213
        %v2528 = vunpack.c.l.b16 %v2214
        %v2529 = vunpack.c.h.b16 %v2214
        %v2530 = vunpack.c.l.b16 %v2215
        %v2531 = vunpack.c.h.b16 %v2215
        %v2532 = vunpack.c.l.b16 %v2216
        %v2533 = vunpack.c.h.b16 %v2216
        %v2534 = vunpack.c.l.b16 %v2217
        %v2535 = vunpack.c.h.b16 %v2217
        %v2536 = vunpack.c.l.b16 %v2218
        %v2537 = vunpack.c.h.b16 %v2218
        %v2538 = vunpack.c.l.b16 %v2219
        %v2539 = vunpack.c.h.b16 %v2219
        %v2540 = vunpack.c.l.b16 %v2220
        %v2541 = vunpack.c.h.b16 %v2220
        %v2542 = vunpack.c.l.b16 %v2221
        %v2543 = vunpack.c.h.b16 %v2221
        %v2544 = vunpack.c.l.b16 %v2222
        %v2545 = vunpack.c.h.b16 %v2222
        %v2546 = vunpack.c.l.b16 %v2223
        %v2547 = vunpack.c.h.b16 %v2223
        %v2548 = vunpack.c.l.b16 %v2224
        %v2549 = vunpack.c.h.b16 %v2224
        %v2550 = vunpack.c.l.b16 %v2225
        %v2551 = vunpack.c.h.b16 %v2225
        %v2552 = vunpack.c.l.b16 %v2226
        %v2553 = vunpack.c.h.b16 %v2226
        %v2554 = vunpack.c.l.b16 %v2227
        %v2555 = vunpack.c.h.b16 %v2227
        %v2556 = vunpack.c.l.b16 %v2228
        %v2557 = vunpack.c.h.b16 %v2228
        %v2558 = vunpack.c.l.b16 %v2229
        %v2559 = vunpack.c.h.b16 %v2229
        %v2560 = vunpack.c.l.b16 %v2230
        %v2561 = vunpack.c.h.b16 %v2230
        %v2562 = vunpack.c.l.b16 %v2231
        %v2563 = vunpack.c.h.b16 %v2231
        %v2564 = vunpack.c.l.b16 %v2232
        %v2565 = vunpack.c.h.b16 %v2232
        %v2566 = vunpack.c.l.b16 %v2233
        %v2567 = vunpack.c.h.b16 %v2233
        %v2568 = vunpack.c.l.b16 %v2234
        %v2569 = vunpack.c.h.b16 %v2234
        %v2570 = vunpack.c.l.b16 %v2235
        %v2571 = vunpack.c.h.b16 %v2235
        %v2572 = vunpack.c.l.b16 %v2236
        %v2573 = vunpack.c.h.b16 %v2236
        %v2574 = vunpack.c.l.b16 %v2237
        %v2575 = vunpack.c.h.b16 %v2237
        %v2576 = vunpack.c.l.b16 %v2238
        %v2577 = vunpack.c.h.b16 %v2238
        %v2578 = vunpack.c.l.b16 %v2239
        %v2579 = vunpack.c.h.b16 %v2239
        %v2580 = vunpack.c.l.b16 %v2240
        %v2581 = vunpack.c.h.b16 %v2240
        %v2582 = vunpack.c.l.b16 %v2241
        %v2583 = vunpack.c.h.b16 %v2241
        %v2584 = vunpack.c.l.b16 %v2242
        %v2585 = vunpack.c.h.b16 %v2242
        %v2586 = vpack.c.b16 %v2524, %v2522
        %v2587 = vpack.c.b16 %v2525, %v2523
        %v2588 = vpack.c.b16 %v2528, %v2526
        %v2589 = vpack.c.b16 %v2529, %v2527
        %v2590 = vpack.c.b16 %v2532, %v2530
        %v2591 = vpack.c.b16 %v2533, %v2531
        %v2592 = vpack.c.b16 %v2536, %v2534
        %v2593 = vpack.c.b16 %v2537, %v2535
        %v2594 = vpack.c.b16 %v2540, %v2538
        %v2595 = vpack.c.b16 %v2541, %v2539
        %v2596 = vpack.c.b16 %v2544, %v2542
        %v2597 = vpack.c.b16 %v2545, %v2543
        %v2598 = vpack.c.b16 %v2548, %v2546
        %v2599 = vpack.c.b16 %v2549, %v2547
        %v2600 = vpack.c.b16 %v2552, %v2550
        %v2601 = vpack.c.b16 %v2553, %v2551
        %v2602 = vpack.c.b16 %v2556, %v2554
        %v2603 = vpack.c.b16 %v2557, %v2555
        %v2604 = vpack.c.b16 %v2560, %v2558
        %v2605 = vpack.c.b16 %v2561, %v2559
        %v2606 = vpack.c.b16 %v2564, %v2562
        %v2607 = vpack.c.b16 %v2565, %v2563
        %v2608 = vpack.c.b16 %v2568, %v2566
        %v2609 = vpack.c.b16 %v2569, %v2567
        %v2610 = vpack.c.b16 %v2572, %v2570
        %v2611 = vpack.c.b16 %v2573, %v2571
        %v2612 = vpack.c.b16 %v2576, %v2574
        %v2613 = vpack.c.b16 %v2577, %v2575
        %v2614 = vpack.c.b16 %v2580, %v2578
        %v2615 = vpack.c.b16 %v2581, %v2579
        %v2616 = vpack.c.b16 %v2584, %v2582
        %v2617 = vpack.c.b16 %v2585, %v2583
        %2650 = vmatprep.subr.bf16.mxu0 %v2601
        %2651 = vmatpush1.bf16.msra.mxu0 %v2600
        %2652 = vmatprep.subr.bf16.mxu0 %v2599
        %2653 = vmatpush1.bf16.msra.mxu0 %v2598
        %2654 = vmatprep.subr.bf16.mxu0 %v2597
        %2655 = vmatpush1.bf16.msra.mxu0 %v2596
        %2656 = vmatprep.subr.bf16.mxu0 %v2595
        %2657 = vmatpush1.bf16.msra.mxu0 %v2594
        %2658 = vmatprep.subr.bf16.mxu0 %v2593
        %2659 = vmatpush1.bf16.msra.mxu0 %v2592
        %2660 = vmatprep.subr.bf16.mxu0 %v2591
        %2661 = vmatpush1.bf16.msra.mxu0 %v2590
        %2662 = vmatprep.subr.bf16.mxu0 %v2589
        %2663 = vmatpush1.bf16.msra.mxu0 %v2588
        %2664 = vmatprep.subr.bf16.mxu0 %v2587
        %2665 = vmatpush1.bf16.msra.mxu0 %v2586
        %2666 = vmatprep.subr.bf16.mxu0 %v2617
        %2667 = vmatpush2.bf16.msra.mxu0 %v2616
        %2668 = vmatprep.subr.bf16.mxu0 %v2615
        %2669 = vmatpush2.bf16.msra.mxu0 %v2614
        %2670 = vmatprep.subr.bf16.mxu0 %v2613
        %2671 = vmatpush2.bf16.msra.mxu0 %v2612
        %2672 = vmatprep.subr.bf16.mxu0 %v2611
        %2673 = vmatpush2.bf16.msra.mxu0 %v2610
        %2674 = vmatprep.subr.bf16.mxu0 %v2609
        %2675 = vmatpush2.bf16.msra.mxu0 %v2608
        %2676 = vmatprep.subr.bf16.mxu0 %v2607
        %2677 = vmatpush2.bf16.msra.mxu0 %v2606
        %2678 = vmatprep.subr.bf16.mxu0 %v2605
        %2679 = vmatpush2.bf16.msra.mxu0 %v2604
        %2680 = vmatprep.subr.bf16.mxu0 %v2603
        %2681 = vmatpush2.bf16.msra.mxu0 %v2602
        %2682 = vmatprep.mubr.bf16.mxu0 %v2209
        %2683 = vmatmul.mubr.bf16.gmra.mxu0 %v2208
        %v2684 = vpop.f32.mrf.mxu0
        %v2685 = vadd.f32 %v2488, %v2684
        %v2686 = vpop.f32.mrf.mxu0
        %v2687 = vadd.f32 %v2489, %v2686
        %v2688 = vpop.f32.mrf.mxu0
        %v2689 = vpop.f32.mrf.mxu0
        %2690 = vdwg.mxu0
        %s2691 = scalar_lea.vmem %s1998, 6
        %v2692 = vld [vmem:[%s2691] ss:$8 sm:$0x3]
        %v2694 = vlaneseq
        %v2695 = vshrl.u32 %v2694, 7
        %v2696 = vsub.s32 0, %v2695
        %v2697 = vrot.slane %v2692, %v2696
        %v2698 = vlaneseq
        %v2699 = vshrl.u32 %v2698, 7
        %v2700 = vsub.s32 1, %v2699
        %v2701 = vrot.slane %v2692, %v2700
        %v2704 = vadd.f32 %v2685, %v2697
        %v2705 = vadd.f32 %v2687, %v2701
        %s2706 = scalar_lea.vmem %s1998, 7
        %v2707 = vld [vmem:[%s2706] ss:$8 sm:$0x3]
        %v2708 = vmul.f32 %v2707, %v2192
        %v2710 = vlaneseq
        %v2711 = vshrl.u32 %v2710, 7
        %v2712 = vsub.s32 0, %v2711
        %v2713 = vrot.slane %v2708, %v2712
        %v2714 = vlaneseq
        %v2715 = vshrl.u32 %v2714, 7
        %v2716 = vsub.s32 1, %v2715
        %v2717 = vrot.slane %v2708, %v2716
        %v2720 = vadd.f32 %v2704, %v2713
        %v2721 = vadd.f32 %v2705, %v2717
        %v2722 = vmax.f32 %v2720, 0.0
        %v2723 = vmax.f32 %v2721, 0.0
        %s2724 = scalar_lea.vmem %s1998, 3
        %v2725 = vld [vmem:[%s2724] ss:$8 sm:$0x3]
        %s2726 = scalar_lea.vmem %s1998, 16
        %v2727 = vld [vmem:[%s2726] ss:$8 sm:$0x3]
        %2729 = vrot.lane.b32.xlu0 %v2727, 2
        %v2730 = vpop.permute.xlu0 %2729
        %v2732 = vmul.f32 %v2727, %v2730
        %2734 = vrot.lane.b32.xlu0 %v2732, 127
        %v2735 = vpop.permute.xlu0 %2734
        %v2737 = vadd.f32 %v2727, %v2735
        %s2738 = scalar_lea.vmem %s381, 8
        %v2739 = vld [vmem:[%s2738] sm:$0x3]
        %v2740 = vunpack.c.l.bf16 %v2739
        %s2741 = scalar_lea.vmem %s381, 10
        %v2742 = vld [vmem:[%s2741] sm:$0x3]
        %v2743 = vunpack.c.l.bf16 %v2742
        %2744 = vset.pattern.permute.xlu0 0
        %2745 = vperm.xlu0 %2744, %v2727
        %v2746 = vpop.permute.xlu0 %2745
        %v2748 = vlaneseq
        %v2749 = vshrl.u32 %v2748, 7
        %v2750 = vsub.s32 0, %v2749
        %v2751 = vrot.slane %v2746, %v2750
        %v2752 = vmul.f32 %v2725, %v2751
        %v2755 = vunpack.c.l.s4 857870592
        %v2756 = vunpack.c.0.s8 %v2755
        %v2757 = vlaneseq
        %v2758 = vshrl.u32 %v2757, 7
        %v2759 = vsub.s32 %v2756, %v2758
        %v2760 = vrot.slane %v2752, %v2759
        %v2762 = vmul.f32 %v2743, %v2760
        %v2763 = vadd.f32 %v2740, %v2762
        %v2765 = vlaneseq
        %v2766 = vshrl.u32 %v2765, 7
        %v2767 = vsub.s32 0, %v2766
        %v2768 = vrot.slane %v2763, %v2767
        %v2769 = vlaneseq
        %v2770 = vshrl.u32 %v2769, 7
        %v2771 = vsub.s32 2, %v2770
        %v2772 = vrot.slane %v2763, %v2771
        %v2775 = vlaneseq
        %v2776 = vshrl.u32 %v2775, 7
        %v2777 = vsub.s32 0, %v2776
        %v2778 = vrot.slane %v2768, %v2777
        %v2779 = vlaneseq
        %v2780 = vshrl.u32 %v2779, 7
        %v2781 = vsub.s32 0, %v2780
        %v2782 = vrot.slane %v2772, %v2781
        %v2783 = vmul.f32 %v2722, %v2778
        %v2784 = vmul.f32 %v2723, %v2782
        %v2785 = vadd.f32 %v2783, %v2784
        %2786 = vadd.xlane.f32.xlu0 %v2785
        %v2787 = vpop.xlane.xlu0 %2786
        %v2789 = vlaneseq
        %v2790 = vshrl.u32 %v2789, 7
        %v2791 = vsub.s32 0, %v2790
        %v2792 = vrot.slane %v2737, %v2791
        %v2794 = vadd.f32 %v2787, %v2792
        %2796 = vrot.lane.b32.xlu0 %v1196, 127
        %v2797 = vpop.permute.xlu0 %2796
        %2800 = vrot.lane.b32.xlu0 %v2794, 1
        %v2801 = vpop.permute.xlu0 %2800
        %vm2803 = vcmask 7168
        %v2804 = vsel %vm2803, %v2797, %v1995
        %vm2805 = vcmask 15360
        %v2806 = vsel %vm2805, %v2804, %v2801
        %vm2807 = vcmask 23552
        %2808 = vst.msk [vmem:[%s394] sm:$0xff] %vm2807, %v2806
        %p2809 = scmp.lt.s32.totalorder %s21, 1
        %s2810 = scalar_select %p2809, %s21, 1
        %s2811 = smul.addr %s2810, 8
        %s2812 = scalar_lea.vmem %s6, %s2811
        // Predicated region
        $region57: #{tpu_custom_call.1} parent=43 // pred_check
          %p2813 = pneg %p190
        $region58: #{tpu_custom_call.1} parent=43 // pred_check_branch
          %2815 = sbr.rel (%p2813) target = $region60
        $region59: #{tpu_custom_call.1} parent=43 // pred_region
          _
        $region60: #{tpu_custom_call.1} parent=43 // pred_fallthru
          _
      $region44: #{tpu_custom_call.1} parent=5 // pred_fallthru
        _
      %p2816 = scmp.le.s32.totalorder 2, %s16
      // Predicated region
      $region61: #{tpu_custom_call.1} parent=5 // pred_check
        %p2817 = pneg %p2816
      $region62: #{tpu_custom_call.1} parent=5 // pred_check_branch
        %2819 = sbr.rel (%p2817) target = $region64
      $region63: #{tpu_custom_call.1} parent=5 // pred_region
        %s2820 = ssub.s32 %s16, 2
        // Predicated region
        $region65: #{tpu_custom_call.1} parent=63 // pred_check
          %p2821 = pneg %p196
        $region66: #{tpu_custom_call.1} parent=63 // pred_check_branch
          %2823 = sbr.rel (%p2821) target = $region68
        $region67: #{tpu_custom_call.1} parent=63 // pred_region
          %p2824 = scmp.lt.s32.totalorder %s22, 1
          %s2825 = scalar_select %p2824, %s22, 1
          %s2826 = smul.addr %s2825, 8
          %s2827 = scalar_lea.vmem %s6, %s2826
        $region68: #{tpu_custom_call.1} parent=63 // pred_fallthru
          _
      $region64: #{tpu_custom_call.1} parent=5 // pred_fallthru
        _
    $region6: #{tpu_custom_call.1} parent=1 // loop_footer
      %s20 = sadd.s32 1, %s16
    $region7: #{tpu_custom_call.1} parent=1 // loop_footer_branch
      %15 = sbr.rel target = $region3
    $region8: #{tpu_custom_call.1} parent=1 // loop_exit
      _
    %2828 = vsyncpa [#allocation3], 1
    %s2829 = scalar_lea.sflag [#allocation3], 1
    %2830 = vsyncpa %s2829, 1
    %2831 = vsyncpa [#allocation5], 1
    %s2832 = scalar_lea.sflag [#allocation5], 1
    %2833 = vsyncpa %s2832, 1

</llo_original>
